<compile_context>
chip_gen: v6e
topology: v6e:2x2x1
jax: 0.10.0
libtpu: 0.0.40
codegen_flags: <defaults>
</compile_context>

<pallas_src>
import functools

import jax
import jax.numpy as jnp
from jax.experimental import pallas as pl
from jax.experimental.pallas import tpu as pltpu


# ----------------------------------------------------------------------------
# Helpers
# ----------------------------------------------------------------------------
def _round_up(x, m):
    return ((x + m - 1) // m) * m


def _pick_tile(dim, candidates):
    """Largest candidate dividing `dim`; else the full extent."""
    for c in candidates:
        if c <= dim and dim % c == 0:
            return c
    return dim


def _head_grouping(heads, d_head):
    """Choose (hg, dh_pad) so that hg divides heads and hg * dh_pad is a
    multiple of 128 (one full lane tile per head group)."""
    if d_head >= 128:
        return 1, _round_up(d_head, 128)
    hg = 1
    while (hg * 2) * d_head <= 128 and heads % (hg * 2) == 0:
        hg *= 2
    return hg, 128 // hg          # hg is a power of two -> dh_pad * hg == 128


def _seq_tiling(n):
    """Padded sequence length and q / kv tile sizes."""
    if n >= 128:
        n_pad = _round_up(n, 128)
        tq = 256 if n_pad % 256 == 0 else 128
        tkv = 512 if n_pad % 512 == 0 else tq
    else:
        n_pad = _round_up(n, 8)
        tq = tkv = n_pad
    return n_pad, tq, tkv


# ----------------------------------------------------------------------------
# Kernel 1: tiled matmul (optionally + bias) with f32 accumulator
# ----------------------------------------------------------------------------
def _matmul_kernel(x_ref, w_ref, o_ref, acc_ref):
    k = pl.program_id(2)

    @pl.when(k == 0)
    def _():
        acc_ref[...] = jnp.zeros_like(acc_ref)

    acc_ref[...] += jnp.dot(x_ref[...].astype(w_ref.dtype), w_ref[...],
                            preferred_element_type=jnp.float32)

    @pl.when(k == pl.num_programs(2) - 1)
    def _():
        o_ref[...] = acc_ref[...].astype(o_ref.dtype)


def _matmul_bias_kernel(x_ref, w_ref, b_ref, o_ref, acc_ref):
    k = pl.program_id(2)

    @pl.when(k == 0)
    def _():
        # Fold the bias into the accumulator init -> finalize is just a cast.
        acc_ref[...] = jnp.broadcast_to(b_ref[...], acc_ref.shape)

    acc_ref[...] += jnp.dot(x_ref[...].astype(w_ref.dtype), w_ref[...],
                            preferred_element_type=jnp.float32)

    @pl.when(k == pl.num_programs(2) - 1)
    def _():
        o_ref[...] = acc_ref[...].astype(o_ref.dtype)


def _linear(x2d, w, bias, out_dtype, *, tm=256, tn=256, tk=512):
    """x2d: (M, K), w: (K, N), bias: (N,) f32 or None -> (M, N)."""
    M, K = x2d.shape
    Kw, N = w.shape
    assert K == Kw, (K, Kw)
    # M is a multiple of 8 by construction (seq padding); keep small fallbacks.
    tm = _pick_tile(M, (tm, 128, 64, 32, 16, 8))
    tn = _pick_tile(N, (tn, 128))
    tk = _pick_tile(K, (tk, 256, 128))

    grid = (M // tm, N // tn, K // tk)
    x_spec = pl.BlockSpec((tm, tk), lambda i, j, k: (i, k))
    w_spec = pl.BlockSpec((tk, tn), lambda i, j, k: (k, j))
    o_spec = pl.BlockSpec((tm, tn), lambda i, j, k: (i, j))
    acc = pltpu.VMEM((tm, tn), jnp.float32)
    cparams = pltpu.CompilerParams(
        dimension_semantics=("parallel", "parallel", "arbitrary"),
        vmem_limit_bytes=32 << 20,
    )

    if bias is None:
        return pl.pallas_call(
            _matmul_kernel,
            out_shape=jax.ShapeDtypeStruct((M, N), out_dtype),
            grid_spec=pltpu.PrefetchScalarGridSpec(
                num_scalar_prefetch=0, grid=grid,
                in_specs=[x_spec, w_spec],
                out_specs=o_spec,
                scratch_shapes=[acc]),
            compiler_params=cparams,
        )(x2d, w)

    bias2d = bias.reshape(1, N).astype(jnp.float32)
    b_spec = pl.BlockSpec((1, tn), lambda i, j, k: (0, j))
    return pl.pallas_call(
        _matmul_bias_kernel,
        out_shape=jax.ShapeDtypeStruct((M, N), out_dtype),
        grid_spec=pltpu.PrefetchScalarGridSpec(
            num_scalar_prefetch=0, grid=grid,
            in_specs=[x_spec, w_spec, b_spec],
            out_specs=o_spec,
            scratch_shapes=[acc]),
        compiler_params=cparams,
    )(x2d, w, bias2d)


# ----------------------------------------------------------------------------
# Kernel 2: flash attention straight on the (B*Np, 3*H*dh_pad) QKV slab
#           grid = (B, H/hg, Np/tq, Np/tkv); hg heads per 128-lane block
# ----------------------------------------------------------------------------
def _flash_attn_kernel(q_ref, k_ref, v_ref, o_ref, m_ref, l_ref, acc_ref, *,
                       scale, hg, dh_pad, n_valid, needs_mask):
    ki = pl.program_id(3)

    @pl.when(ki == 0)
    def _():
        m_ref[...] = jnp.full_like(m_ref, -jnp.inf)
        l_ref[...] = jnp.zeros_like(l_ref)
        acc_ref[...] = jnp.zeros_like(acc_ref)

    q = q_ref[...] * scale                       # (tq, hg*dh_pad), scale on q
    k = k_ref[...]                               # (tkv, hg*dh_pad)
    v = v_ref[...]
    tq, tkv = q.shape[0], k.shape[0]

    if needs_mask:
        kv_pos = jax.lax.broadcasted_iota(jnp.int32, (tq, tkv), 1) + ki * tkv
        kv_ok = kv_pos < n_valid

    # Unrolled loop over the heads packed into this 128-lane block.
    for h in range(hg):
        c0, c1 = h * dh_pad, (h + 1) * dh_pad
        q_h = q[:, c0:c1]
        k_h = k[:, c0:c1]
        v_h = v[:, c0:c1]

        s = jax.lax.dot_general(q_h, k_h, (((1,), (1,)), ((), ())),
                                preferred_element_type=jnp.float32)
        if needs_mask:
            s = jnp.where(kv_ok, s, jnp.float32(-1e30))

        m_prev = m_ref[h]                        # (tq, 1)
        m_new = jnp.maximum(m_prev, s.max(axis=-1, keepdims=True))
        alpha = jnp.exp(m_prev - m_new)
        p = jnp.exp(s - m_new)

        l_ref[h] = alpha * l_ref[h] + p.sum(axis=-1, keepdims=True)
        acc_ref[h] = alpha * acc_ref[h] + jnp.dot(
            p.astype(v_h.dtype), v_h, preferred_element_type=jnp.float32)
        m_ref[h] = m_new

    @pl.when(ki == pl.num_programs(3) - 1)
    def _():
        inv_l = pl.reciprocal(l_ref[...], approx=True)       # (hg, tq, 1), EUP
        parts = [acc_ref[h] * inv_l[h] for h in range(hg)]
        # One full-width (tq, 128) store into the lane-dense output block.
        o_ref[...] = jnp.concatenate(parts, axis=-1).astype(o_ref.dtype)


def _flash_attention(qkv, *, B, Np, heads, hg, dh_pad, scale, n_valid,
                     tq, tkv, out_dtype):
    """qkv: (B*Np, 3*heads*dh_pad) -> attention output (B*Np, heads*dh_pad)."""
    Hg = heads // hg                      # number of head groups
    G = hg * dh_pad                       # lane width of one head group (128+)
    nq, nk = Np // tq, Np // tkv
    BN = B * Np
    assert qkv.shape == (BN, 3 * Hg * G), (qkv.shape, BN, 3 * Hg * G)

    kernel = functools.partial(
        _flash_attn_kernel, scale=scale, hg=hg, dh_pad=dh_pad,
        n_valid=n_valid, needs_mask=(Np != n_valid))

    q_spec = pl.BlockSpec((tq, G), lambda b, h, qi, ki: (b * nq + qi, h))
    k_spec = pl.BlockSpec((tkv, G), lambda b, h, qi, ki: (b * nk + ki, Hg + h))
    v_spec = pl.BlockSpec((tkv, G), lambda b, h, qi, ki: (b * nk + ki, 2 * Hg + h))
    o_spec = pl.BlockSpec((tq, G), lambda b, h, qi, ki: (b * nq + qi, h))

    return pl.pallas_call(
        kernel,
        out_shape=jax.ShapeDtypeStruct((BN, Hg * G), out_dtype),
        grid_spec=pltpu.PrefetchScalarGridSpec(
            num_scalar_prefetch=0,
            grid=(B, Hg, nq, nk),
            in_specs=[q_spec, k_spec, v_spec],
            out_specs=o_spec,
            scratch_shapes=[
                pltpu.VMEM((hg, tq, 1), jnp.float32),      # running max m
                pltpu.VMEM((hg, tq, 1), jnp.float32),      # running denom l
                pltpu.VMEM((hg, tq, dh_pad), jnp.float32),  # output accumulator
            ],
        ),
        compiler_params=pltpu.CompilerParams(
            dimension_semantics=("parallel", "parallel", "parallel", "arbitrary"),
            vmem_limit_bytes=32 << 20,
        ),
    )(qkv, qkv, qkv)


# ----------------------------------------------------------------------------
# One-time parameter preparation (cast + head-dim padding), outside the
# per-call path so no per-step HBM pass over the weights.
# ----------------------------------------------------------------------------
def prepare_attention_params(w_qkv, w_out, b_out, heads, d_head,
                             compute_dtype=jnp.bfloat16):
    """w_qkv: (D, 3*H*dh) [no bias]; w_out: (H*dh, D); b_out: (D,)."""
    D = w_qkv.shape[0]
    hg, dh_pad = _head_grouping(heads, d_head)
    pad = dh_pad - d_head

    wq = w_qkv.reshape(D, 3, heads, d_head)
    wq = jnp.pad(wq, ((0, 0), (0, 0), (0, 0), (0, pad)))
    wq = wq.reshape(D, 3 * heads * dh_pad).astype(compute_dtype)

    wo = w_out.reshape(heads, d_head, D)
    wo = jnp.pad(wo, ((0, 0), (0, pad), (0, 0)))
    wo = wo.reshape(heads * dh_pad, D).astype(compute_dtype)

    return wq, wo, b_out.astype(jnp.float32)


# ----------------------------------------------------------------------------
# Full Attention forward pass (eval mode: dropout = identity)
# ----------------------------------------------------------------------------
@functools.partial(jax.jit, static_argnames=("heads", "d_head"))
def attention_forward(x, w_qkv_p, w_out_p, b_out, *, heads, d_head):
    """x: (B, N, D); prepared params from prepare_attention_params."""
    B, N, D = x.shape
    out_dtype = x.dtype
    compute_dtype = w_qkv_p.dtype
    hg, dh_pad = _head_grouping(heads, d_head)
    inner_pad = heads * dh_pad
    assert w_qkv_p.shape == (D, 3 * inner_pad)
    assert w_out_p.shape == (inner_pad, D)
    scale = float(d_head) ** -0.5

    # Pad sequence to a tile multiple (masked inside the attention kernel).
    Np, tq, tkv = _seq_tiling(N)
    if Np != N:
        x = jnp.pad(x, ((0, 0), (0, Np - N), (0, 0)))
    x2d = x.reshape(B * Np, D)

    # 1) QKV projection (no bias); activation cast fused into the kernel.
    qkv = _linear(x2d, w_qkv_p, None, compute_dtype)        # (B*Np, 3*inner_pad)

    # 2) Flash attention directly on the QKV slab; output is (B*Np, inner_pad)
    #    already in merged-head layout for the output projection.
    o = _flash_attention(qkv, B=B, Np=Np, heads=heads, hg=hg, dh_pad=dh_pad,
                         scale=scale, n_valid=N, tq=tq, tkv=tkv,
                         out_dtype=compute_dtype)

    # 3) Output projection with bias.
    out = _linear(o, w_out_p, b_out, out_dtype)             # (B*Np, D)
    out = out.reshape(B, Np, D)
    if Np != N:
        out = out[:, :N, :]
    return out


# ----------------------------------------------------------------------------
# Pure-JAX reference (torch module semantics, eval mode)
# ----------------------------------------------------------------------------
def reference_attention(x, w_qkv, w_out, b_out, heads, d_head):
    B, N, D = x.shape
    inner = heads * d_head
    scale = float(d_head) ** -0.5
    hp = jax.lax.Precision.HIGHEST

    qkv = jnp.dot(x, w_qkv, precision=hp)
    q, k, v = jnp.split(qkv, 3, axis=-1)

    def split_heads(t):
        return t.reshape(B, N, heads, d_head).transpose(0, 2, 1, 3)

    q, k, v = map(split_heads, (q, k, v))
    dots = jnp.einsum("bhnd,bhmd->bhnm", q, k, precision=hp) * scale
    attn = jax.nn.softmax(dots, axis=-1)
    out = jnp.einsum("bhnm,bhmd->bhnd", attn, v, precision=hp)
    out = out.transpose(0, 2, 1, 3).reshape(B, N, inner)
    return jnp.dot(out, w_out, precision=hp) + b_out


# ----------------------------------------------------------------------------
# Test
# ----------------------------------------------------------------------------
def _run_case(key, B, N, D, H, DH):
    inner = H * DH
    kx, k1, k2, k3 = jax.random.split(key, 4)
    x = jax.random.normal(kx, (B, N, D), dtype=jnp.float32)

    lim_qkv = 1.0 / (D ** 0.5)
    lim_out = 1.0 / (inner ** 0.5)
    w_qkv = jax.random.uniform(k1, (D, 3 * inner), jnp.float32, -lim_qkv, lim_qkv)
    w_out = jax.random.uniform(k2, (inner, D), jnp.float32, -lim_out, lim_out)
    b_out = jax.random.uniform(k3, (D,), jnp.float32, -lim_out, lim_out)

    ref = reference_attention(x, w_qkv, w_out, b_out, H, DH)

    # Performance configuration: bf16 MXU operands, f32 accumulation.
    p_bf16 = prepare_attention_params(w_qkv, w_out, b_out, H, DH, jnp.bfloat16)
    out_bf16 = attention_forward(x, *p_bf16, heads=H, d_head=DH)
    out_bf16 = jax.block_until_ready(out_bf16)

    # f32 compute path for a tighter structural / numerical check.
    p_f32 = prepare_attention_params(w_qkv, w_out, b_out, H, DH, jnp.float32)
    out_f32 = attention_forward(x, *p_f32, heads=H, d_head=DH)
    out_f32 = jax.block_until_ready(out_f32)

    assert out_bf16.shape == (B, N, D) and out_f32.shape == (B, N, D)
    err32 = float(jnp.max(jnp.abs(out_f32 - ref)))
    assert jnp.allclose(out_f32, ref, atol=1e-2, rtol=1e-2), err32
    err16 = float(jnp.max(jnp.abs(out_bf16.astype(jnp.float32) - ref)))
    assert jnp.allclose(out_bf16.astype(jnp.float32), ref, atol=5e-2, rtol=5e-2), err16


if __name__ == "__main__":
    key = jax.random.PRNGKey(0)
    k_a, k_b = jax.random.split(key)

    # Small config matching the module: batch=2, seq=8, d_hidn=32,
    # attn_head=4, d_head=8 (dropout=0 / eval).
    _run_case(k_a, B=2, N=8, D=32, H=4, DH=8)

    # Non-multiple-of-8 sequence length -> exercises seq padding + KV masking.
    _run_case(k_b, B=1, N=5, D=32, H=2, DH=8)

    print("KERNEL_OK")
</pallas_src>

<mosaic_0001>
module attributes {stable_mosaic.version = 11 : i64} {
  func.func @_matmul_bias_kernel(%arg0: i32, %arg1: i32, %arg2: i32, %arg3: memref<16x128xbf16, #tpu.memory_space<vmem>>, %arg4: memref<128x32xbf16, #tpu.memory_space<vmem>>, %arg5: memref<1x32xf32, #tpu.memory_space<vmem>>, %arg6: memref<16x32xf32, #tpu.memory_space<vmem>>, %arg7: memref<16x32xf32, #tpu.memory_space<vmem>>) attributes {dimension_semantics = [#tpu.dimension_semantics<parallel>, #tpu.dimension_semantics<parallel>, #tpu.dimension_semantics<arbitrary>], iteration_bounds = array<i64: 1, 1, 1>, scalar_prefetch = 0 : i64, scratch_operands = 1 : i64, tpu.core_type = #tpu.core_type<tc>, window_params = [{transform_indices = @transform_0, window_bounds = array<i64: 16, 128>}, {transform_indices = @transform_1, window_bounds = array<i64: 128, 32>}, {transform_indices = @transform_2, window_bounds = array<i64: 1, 32>}, {transform_indices = @transform_3, window_bounds = array<i64: 16, 32>}]} {
    %c0_i32 = arith.constant 0 : i32
    %0 = arith.cmpi eq, %arg2, %c0_i32 : i32
    %1 = arith.extui %0 : i1 to i32
    %c0_i32_0 = arith.constant 0 : i32
    %2 = arith.cmpi ne, %1, %c0_i32_0 : i32
    scf.if %2 {
      %c0_10 = arith.constant 0 : index
      %c0_11 = arith.constant 0 : index
      %12 = vector.load %arg5[%c0_10, %c0_11] : memref<1x32xf32, #tpu.memory_space<vmem>>, vector<1x32xf32>
      %13 = vector.shape_cast %12 : vector<1x32xf32> to vector<1x32xf32>
      %14 = vector.broadcast %13 : vector<1x32xf32> to vector<16x32xf32>
      %c0_12 = arith.constant 0 : index
      %c0_13 = arith.constant 0 : index
      %15 = vector.load %arg7[%c0_12, %c0_13] : memref<16x32xf32, #tpu.memory_space<vmem>>, vector<16x32xf32>
      tpu.vector_store %arg7[%c0_12, %c0_13], %14 {strides = array<i32>} : memref<16x32xf32, #tpu.memory_space<vmem>>, vector<16x32xf32>,
    } else {
    }
    %c0 = arith.constant 0 : index
    %c0_1 = arith.constant 0 : index
    %3 = vector.load %arg7[%c0, %c0_1] : memref<16x32xf32, #tpu.memory_space<vmem>>, vector<16x32xf32>
    %c0_2 = arith.constant 0 : index
    %c0_3 = arith.constant 0 : index
    %4 = vector.load %arg3[%c0_2, %c0_3] : memref<16x128xbf16, #tpu.memory_space<vmem>>, vector<16x128xbf16>
    %c0_4 = arith.constant 0 : index
    %c0_5 = arith.constant 0 : index
    %5 = vector.load %arg4[%c0_4, %c0_5] : memref<128x32xbf16, #tpu.memory_space<vmem>>, vector<128x32xbf16>
    %cst = arith.constant dense<0.000000e+00> : vector<16x32xf32>
    %6 = tpu.matmul %4, %5, %cst {dimension_numbers = #tpu.dot_dimension_numbers<[1], [0], [0], [1], [0, 0, 1, 1], [], []>} : vector<16x128xbf16>, vector<128x32xbf16>, vector<16x32xf32> -> vector<16x32xf32>
    %7 = arith.addf %3, %6 : vector<16x32xf32>
    %c0_6 = arith.constant 0 : index
    %c0_7 = arith.constant 0 : index
    %8 = vector.load %arg7[%c0_6, %c0_7] : memref<16x32xf32, #tpu.memory_space<vmem>>, vector<16x32xf32>
    tpu.vector_store %arg7[%c0_6, %c0_7], %7 {strides = array<i32>} : memref<16x32xf32, #tpu.memory_space<vmem>>, vector<16x32xf32>,
    %c0_i32_8 = arith.constant 0 : i32
    %9 = arith.cmpi eq, %arg2, %c0_i32_8 : i32
    %10 = arith.extui %9 : i1 to i32
    %c0_i32_9 = arith.constant 0 : i32
    %11 = arith.cmpi ne, %10, %c0_i32_9 : i32
    scf.if %11 {
      %c0_10 = arith.constant 0 : index
      %c0_11 = arith.constant 0 : index
      %12 = vector.load %arg7[%c0_10, %c0_11] : memref<16x32xf32, #tpu.memory_space<vmem>>, vector<16x32xf32>
      %c0_12 = arith.constant 0 : index
      %c0_13 = arith.constant 0 : index
      %13 = vector.load %arg6[%c0_12, %c0_13] : memref<16x32xf32, #tpu.memory_space<vmem>>, vector<16x32xf32>
      tpu.vector_store %arg6[%c0_12, %c0_13], %12 {strides = array<i32>} : memref<16x32xf32, #tpu.memory_space<vmem>>, vector<16x32xf32>,
    } else {
    }
    return
  }
  func.func @transform_0(%arg0: i32, %arg1: i32, %arg2: i32) -> (i32, i32) {
    %c0_i32 = arith.constant 0 : i32
    return %arg0, %arg2 : i32, i32
  }
  func.func @transform_1(%arg0: i32, %arg1: i32, %arg2: i32) -> (i32, i32) {
    %c0_i32 = arith.constant 0 : i32
    return %arg2, %arg1 : i32, i32
  }
  func.func @transform_2(%arg0: i32, %arg1: i32, %arg2: i32) -> (i32, i32) {
    %c0_i32 = arith.constant 0 : i32
    %c0_i32_0 = arith.constant 0 : i32
    return %c0_i32, %arg1 : i32, i32
  }
  func.func @transform_3(%arg0: i32, %arg1: i32, %arg2: i32) -> (i32, i32) {
    %c0_i32 = arith.constant 0 : i32
    return %arg0, %arg1 : i32, i32
  }
}

module attributes {stable_mosaic.version = 11 : i64} {
  func.func @_matmul_kernel(%arg0: i32, %arg1: i32, %arg2: i32, %arg3: memref<16x32xf32, #tpu.memory_space<vmem>>, %arg4: memref<32x128xbf16, #tpu.memory_space<vmem>>, %arg5: memref<16x128xbf16, #tpu.memory_space<vmem>>, %arg6: memref<16x128xf32, #tpu.memory_space<vmem>>) attributes {dimension_semantics = [#tpu.dimension_semantics<parallel>, #tpu.dimension_semantics<parallel>, #tpu.dimension_semantics<arbitrary>], iteration_bounds = array<i64: 1, 3, 1>, scalar_prefetch = 0 : i64, scratch_operands = 1 : i64, tpu.core_type = #tpu.core_type<tc>, window_params = [{transform_indices = @transform_0, window_bounds = array<i64: 16, 32>}, {transform_indices = @transform_1, window_bounds = array<i64: 32, 128>}, {transform_indices = @transform_2, window_bounds = array<i64: 16, 128>}]} {
    %c0_i32 = arith.constant 0 : i32
    %0 = arith.cmpi eq, %arg2, %c0_i32 : i32
    %1 = arith.extui %0 : i1 to i32
    %c0_i32_0 = arith.constant 0 : i32
    %2 = arith.cmpi ne, %1, %c0_i32_0 : i32
    scf.if %2 {
      %cst_10 = arith.constant 0.000000e+00 : f32
      %13 = vector.broadcast %cst_10 : f32 to vector<16x128xf32>
      %c0_11 = arith.constant 0 : index
      %c0_12 = arith.constant 0 : index
      %14 = vector.load %arg6[%c0_11, %c0_12] : memref<16x128xf32, #tpu.memory_space<vmem>>, vector<16x128xf32>
      tpu.vector_store %arg6[%c0_11, %c0_12], %13 {strides = array<i32>} : memref<16x128xf32, #tpu.memory_space<vmem>>, vector<16x128xf32>,
    } else {
    }
    %c0 = arith.constant 0 : index
    %c0_1 = arith.constant 0 : index
    %3 = vector.load %arg6[%c0, %c0_1] : memref<16x128xf32, #tpu.memory_space<vmem>>, vector<16x128xf32>
    %c0_2 = arith.constant 0 : index
    %c0_3 = arith.constant 0 : index
    %4 = vector.load %arg3[%c0_2, %c0_3] : memref<16x32xf32, #tpu.memory_space<vmem>>, vector<16x32xf32>
    %5 = arith.truncf %4 : vector<16x32xf32> to vector<16x32xbf16>
    %c0_4 = arith.constant 0 : index
    %c0_5 = arith.constant 0 : index
    %6 = vector.load %arg4[%c0_4, %c0_5] : memref<32x128xbf16, #tpu.memory_space<vmem>>, vector<32x128xbf16>
    %cst = arith.constant dense<0.000000e+00> : vector<16x128xf32>
    %7 = tpu.matmul %5, %6, %cst {dimension_numbers = #tpu.dot_dimension_numbers<[1], [0], [0], [1], [0, 0, 1, 1], [], []>} : vector<16x32xbf16>, vector<32x128xbf16>, vector<16x128xf32> -> vector<16x128xf32>
    %8 = arith.addf %3, %7 : vector<16x128xf32>
    %c0_6 = arith.constant 0 : index
    %c0_7 = arith.constant 0 : index
    %9 = vector.load %arg6[%c0_6, %c0_7] : memref<16x128xf32, #tpu.memory_space<vmem>>, vector<16x128xf32>
    tpu.vector_store %arg6[%c0_6, %c0_7], %8 {strides = array<i32>} : memref<16x128xf32, #tpu.memory_space<vmem>>, vector<16x128xf32>,
    %c0_i32_8 = arith.constant 0 : i32
    %10 = arith.cmpi eq, %arg2, %c0_i32_8 : i32
    %11 = arith.extui %10 : i1 to i32
    %c0_i32_9 = arith.constant 0 : i32
    %12 = arith.cmpi ne, %11, %c0_i32_9 : i32
    scf.if %12 {
      %c0_10 = arith.constant 0 : index
      %c0_11 = arith.constant 0 : index
      %13 = vector.load %arg6[%c0_10, %c0_11] : memref<16x128xf32, #tpu.memory_space<vmem>>, vector<16x128xf32>
      %14 = arith.truncf %13 : vector<16x128xf32> to vector<16x128xbf16>
      %c0_12 = arith.constant 0 : index
      %c0_13 = arith.constant 0 : index
      %15 = vector.load %arg5[%c0_12, %c0_13] : memref<16x128xbf16, #tpu.memory_space<vmem>>, vector<16x128xbf16>
      tpu.vector_store %arg5[%c0_12, %c0_13], %14 {strides = array<i32>} : memref<16x128xbf16, #tpu.memory_space<vmem>>, vector<16x128xbf16>,
    } else {
    }
    return
  }
  func.func @transform_0(%arg0: i32, %arg1: i32, %arg2: i32) -> (i32, i32) {
    %c0_i32 = arith.constant 0 : i32
    return %arg0, %arg2 : i32, i32
  }
  func.func @transform_1(%arg0: i32, %arg1: i32, %arg2: i32) -> (i32, i32) {
    %c0_i32 = arith.constant 0 : i32
    return %arg2, %arg1 : i32, i32
  }
  func.func @transform_2(%arg0: i32, %arg1: i32, %arg2: i32) -> (i32, i32) {
    %c0_i32 = arith.constant 0 : i32
    return %arg0, %arg1 : i32, i32
  }
}

module attributes {stable_mosaic.version = 11 : i64} {
  func.func @_flash_attn_kernel(%arg0: i32, %arg1: i32, %arg2: i32, %arg3: i32, %arg4: memref<8x128xbf16, #tpu.memory_space<vmem>>, %arg5: memref<8x128xbf16, #tpu.memory_space<vmem>>, %arg6: memref<8x128xbf16, #tpu.memory_space<vmem>>, %arg7: memref<8x128xbf16, #tpu.memory_space<vmem>>, %arg8: memref<4x8x1xf32, #tpu.memory_space<vmem>>, %arg9: memref<4x8x1xf32, #tpu.memory_space<vmem>>, %arg10: memref<4x8x32xf32, #tpu.memory_space<vmem>>) attributes {dimension_semantics = [#tpu.dimension_semantics<parallel>, #tpu.dimension_semantics<parallel>, #tpu.dimension_semantics<parallel>, #tpu.dimension_semantics<arbitrary>], iteration_bounds = array<i64: 2, 1, 1, 1>, scalar_prefetch = 0 : i64, scratch_operands = 3 : i64, tpu.core_type = #tpu.core_type<tc>, window_params = [{transform_indices = @transform_0, window_bounds = array<i64: 8, 128>}, {transform_indices = @transform_1, window_bounds = array<i64: 8, 128>}, {transform_indices = @transform_2, window_bounds = array<i64: 8, 128>}, {transform_indices = @transform_3, window_bounds = array<i64: 8, 128>}]} {
    %c0_i32 = arith.constant 0 : i32
    %0 = arith.cmpi eq, %arg3, %c0_i32 : i32
    %1 = arith.extui %0 : i1 to i32
    %c0_i32_0 = arith.constant 0 : i32
    %2 = arith.cmpi ne, %1, %c0_i32_0 : i32
    scf.if %2 {
      %cst_93 = arith.constant 0xFF800000 : f32
      %155 = vector.broadcast %cst_93 : f32 to vector<4x8x1xf32>
      %c0_94 = arith.constant 0 : index
      %c0_95 = arith.constant 0 : index
      %c0_96 = arith.constant 0 : index
      %156 = vector.load %arg8[%c0_94, %c0_95, %c0_96] : memref<4x8x1xf32, #tpu.memory_space<vmem>>, vector<4x8x1xf32>
      tpu.vector_store %arg8[%c0_94, %c0_95, %c0_96], %155 {strides = array<i32>} : memref<4x8x1xf32, #tpu.memory_space<vmem>>, vector<4x8x1xf32>,
      %cst_97 = arith.constant 0.000000e+00 : f32
      %157 = vector.broadcast %cst_97 : f32 to vector<4x8x1xf32>
      %c0_98 = arith.constant 0 : index
      %c0_99 = arith.constant 0 : index
      %c0_100 = arith.constant 0 : index
      %158 = vector.load %arg9[%c0_98, %c0_99, %c0_100] : memref<4x8x1xf32, #tpu.memory_space<vmem>>, vector<4x8x1xf32>
      tpu.vector_store %arg9[%c0_98, %c0_99, %c0_100], %157 {strides = array<i32>} : memref<4x8x1xf32, #tpu.memory_space<vmem>>, vector<4x8x1xf32>,
      %cst_101 = arith.constant 0.000000e+00 : f32
      %159 = vector.broadcast %cst_101 : f32 to vector<4x8x32xf32>
      %c0_102 = arith.constant 0 : index
      %c0_103 = arith.constant 0 : index
      %c0_104 = arith.constant 0 : index
      %160 = vector.load %arg10[%c0_102, %c0_103, %c0_104] : memref<4x8x32xf32, #tpu.memory_space<vmem>>, vector<4x8x32xf32>
      tpu.vector_store %arg10[%c0_102, %c0_103, %c0_104], %159 {strides = array<i32>} : memref<4x8x32xf32, #tpu.memory_space<vmem>>, vector<4x8x32xf32>,
    } else {
    }
    %c0 = arith.constant 0 : index
    %c0_1 = arith.constant 0 : index
    %3 = vector.load %arg4[%c0, %c0_1] : memref<8x128xbf16, #tpu.memory_space<vmem>>, vector<8x128xbf16>
    %cst = arith.constant 3.535160e-01 : bf16
    %4 = vector.broadcast %cst : bf16 to vector<8x128xbf16>
    %5 = arith.mulf %3, %4 : vector<8x128xbf16>
    %c0_2 = arith.constant 0 : index
    %c0_3 = arith.constant 0 : index
    %6 = vector.load %arg5[%c0_2, %c0_3] : memref<8x128xbf16, #tpu.memory_space<vmem>>, vector<8x128xbf16>
    %c0_4 = arith.constant 0 : index
    %c0_5 = arith.constant 0 : index
    %7 = vector.load %arg6[%c0_4, %c0_5] : memref<8x128xbf16, #tpu.memory_space<vmem>>, vector<8x128xbf16>
    %8 = vector.extract_strided_slice %5 {offsets = [0, 0], sizes = [8, 32], strides = [1, 1]} : vector<8x128xbf16> to vector<8x32xbf16>
    %9 = vector.extract_strided_slice %6 {offsets = [0, 0], sizes = [8, 32], strides = [1, 1]} : vector<8x128xbf16> to vector<8x32xbf16>
    %10 = vector.extract_strided_slice %7 {offsets = [0, 0], sizes = [8, 32], strides = [1, 1]} : vector<8x128xbf16> to vector<8x32xbf16>
    %cst_6 = arith.constant dense<0.000000e+00> : vector<8x8xf32>
    %11 = tpu.matmul %8, %9, %cst_6 {dimension_numbers = #tpu.dot_dimension_numbers<[1], [1], [0], [0], [0, 0, 1, 0], [], []>} : vector<8x32xbf16>, vector<8x32xbf16>, vector<8x8xf32> -> vector<8x8xf32>
    %c0_7 = arith.constant 0 : index
    %c0_8 = arith.constant 0 : index
    %c0_9 = arith.constant 0 : index
    %12 = vector.load %arg8[%c0_7, %c0_8, %c0_9] : memref<4x8x1xf32, #tpu.memory_space<vmem>>, vector<1x8x1xf32>
    %13 = vector.shape_cast %12 : vector<1x8x1xf32> to vector<8x1xf32>
    %cst_10 = arith.constant dense<0xFF800000> : vector<8xf32>
    %14 = vector.multi_reduction <maximumf>, %11, %cst_10 [1] : vector<8x8xf32> to vector<8xf32>
    %15 = vector.shape_cast %14 : vector<8xf32> to vector<8x1xf32>
    %16 = arith.maximumf %13, %15 : vector<8x1xf32>
    %17 = arith.subf %13, %16 : vector<8x1xf32>
    %18 = math.exp %17 : vector<8x1xf32>
    %19 = vector.broadcast %16 : vector<8x1xf32> to vector<8x8xf32>
    %20 = arith.subf %11, %19 : vector<8x8xf32>
    %21 = math.exp %20 : vector<8x8xf32>
    %c0_11 = arith.constant 0 : index
    %c0_12 = arith.constant 0 : index
    %c0_13 = arith.constant 0 : index
    %22 = vector.load %arg9[%c0_11, %c0_12, %c0_13] : memref<4x8x1xf32, #tpu.memory_space<vmem>>, vector<1x8x1xf32>
    %23 = vector.shape_cast %22 : vector<1x8x1xf32> to vector<8x1xf32>
    %24 = arith.mulf %18, %23 : vector<8x1xf32>
    %cst_14 = arith.constant dense<0.000000e+00> : vector<8xf32>
    %25 = vector.multi_reduction <add>, %21, %cst_14 [1] : vector<8x8xf32> to vector<8xf32>
    %26 = vector.shape_cast %25 : vector<8xf32> to vector<8x1xf32>
    %27 = arith.addf %24, %26 : vector<8x1xf32>
    %c0_15 = arith.constant 0 : index
    %c0_16 = arith.constant 0 : index
    %c0_17 = arith.constant 0 : index
    %28 = vector.load %arg9[%c0_15, %c0_16, %c0_17] : memref<4x8x1xf32, #tpu.memory_space<vmem>>, vector<1x8x1xf32>
    %29 = vector.shape_cast %28 : vector<1x8x1xf32> to vector<8x1xf32>
    %30 = vector.shape_cast %27 : vector<8x1xf32> to vector<1x8x1xf32>
    tpu.vector_store %arg9[%c0_15, %c0_16, %c0_17], %30 {strides = array<i32>} : memref<4x8x1xf32, #tpu.memory_space<vmem>>, vector<1x8x1xf32>,
    %c0_18 = arith.constant 0 : index
    %c0_19 = arith.constant 0 : index
    %c0_20 = arith.constant 0 : index
    %31 = vector.load %arg10[%c0_18, %c0_19, %c0_20] : memref<4x8x32xf32, #tpu.memory_space<vmem>>, vector<1x8x32xf32>
    %32 = vector.shape_cast %31 : vector<1x8x32xf32> to vector<8x32xf32>
    %33 = vector.broadcast %18 : vector<8x1xf32> to vector<8x32xf32>
    %34 = arith.mulf %33, %32 : vector<8x32xf32>
    %35 = arith.truncf %21 : vector<8x8xf32> to vector<8x8xbf16>
    %cst_21 = arith.constant dense<0.000000e+00> : vector<8x32xf32>
    %36 = tpu.matmul %35, %10, %cst_21 {dimension_numbers = #tpu.dot_dimension_numbers<[1], [0], [0], [1], [0, 0, 1, 1], [], []>} : vector<8x8xbf16>, vector<8x32xbf16>, vector<8x32xf32> -> vector<8x32xf32>
    %37 = arith.addf %34, %36 : vector<8x32xf32>
    %c0_22 = arith.constant 0 : index
    %c0_23 = arith.constant 0 : index
    %c0_24 = arith.constant 0 : index
    %38 = vector.load %arg10[%c0_22, %c0_23, %c0_24] : memref<4x8x32xf32, #tpu.memory_space<vmem>>, vector<1x8x32xf32>
    %39 = vector.shape_cast %38 : vector<1x8x32xf32> to vector<8x32xf32>
    %40 = vector.shape_cast %37 : vector<8x32xf32> to vector<1x8x32xf32>
    tpu.vector_store %arg10[%c0_22, %c0_23, %c0_24], %40 {strides = array<i32>} : memref<4x8x32xf32, #tpu.memory_space<vmem>>, vector<1x8x32xf32>,
    %c0_25 = arith.constant 0 : index
    %c0_26 = arith.constant 0 : index
    %c0_27 = arith.constant 0 : index
    %41 = vector.load %arg8[%c0_25, %c0_26, %c0_27] : memref<4x8x1xf32, #tpu.memory_space<vmem>>, vector<1x8x1xf32>
    %42 = vector.shape_cast %41 : vector<1x8x1xf32> to vector<8x1xf32>
    %43 = vector.shape_cast %16 : vector<8x1xf32> to vector<1x8x1xf32>
    tpu.vector_store %arg8[%c0_25, %c0_26, %c0_27], %43 {strides = array<i32>} : memref<4x8x1xf32, #tpu.memory_space<vmem>>, vector<1x8x1xf32>,
    %44 = vector.extract_strided_slice %5 {offsets = [0, 32], sizes = [8, 32], strides = [1, 1]} : vector<8x128xbf16> to vector<8x32xbf16>
    %45 = vector.extract_strided_slice %6 {offsets = [0, 32], sizes = [8, 32], strides = [1, 1]} : vector<8x128xbf16> to vector<8x32xbf16>
    %46 = vector.extract_strided_slice %7 {offsets = [0, 32], sizes = [8, 32], strides = [1, 1]} : vector<8x128xbf16> to vector<8x32xbf16>
    %cst_28 = arith.constant dense<0.000000e+00> : vector<8x8xf32>
    %47 = tpu.matmul %44, %45, %cst_28 {dimension_numbers = #tpu.dot_dimension_numbers<[1], [1], [0], [0], [0, 0, 1, 0], [], []>} : vector<8x32xbf16>, vector<8x32xbf16>, vector<8x8xf32> -> vector<8x8xf32>
    %c1 = arith.constant 1 : index
    %c0_29 = arith.constant 0 : index
    %c0_30 = arith.constant 0 : index
    %48 = vector.load %arg8[%c1, %c0_29, %c0_30] : memref<4x8x1xf32, #tpu.memory_space<vmem>>, vector<1x8x1xf32>
    %49 = vector.shape_cast %48 : vector<1x8x1xf32> to vector<8x1xf32>
    %cst_31 = arith.constant dense<0xFF800000> : vector<8xf32>
    %50 = vector.multi_reduction <maximumf>, %47, %cst_31 [1] : vector<8x8xf32> to vector<8xf32>
    %51 = vector.shape_cast %50 : vector<8xf32> to vector<8x1xf32>
    %52 = arith.maximumf %49, %51 : vector<8x1xf32>
    %53 = arith.subf %49, %52 : vector<8x1xf32>
    %54 = math.exp %53 : vector<8x1xf32>
    %55 = vector.broadcast %52 : vector<8x1xf32> to vector<8x8xf32>
    %56 = arith.subf %47, %55 : vector<8x8xf32>
    %57 = math.exp %56 : vector<8x8xf32>
    %c1_32 = arith.constant 1 : index
    %c0_33 = arith.constant 0 : index
    %c0_34 = arith.constant 0 : index
    %58 = vector.load %arg9[%c1_32, %c0_33, %c0_34] : memref<4x8x1xf32, #tpu.memory_space<vmem>>, vector<1x8x1xf32>
    %59 = vector.shape_cast %58 : vector<1x8x1xf32> to vector<8x1xf32>
    %60 = arith.mulf %54, %59 : vector<8x1xf32>
    %cst_35 = arith.constant dense<0.000000e+00> : vector<8xf32>
    %61 = vector.multi_reduction <add>, %57, %cst_35 [1] : vector<8x8xf32> to vector<8xf32>
    %62 = vector.shape_cast %61 : vector<8xf32> to vector<8x1xf32>
    %63 = arith.addf %60, %62 : vector<8x1xf32>
    %c1_36 = arith.constant 1 : index
    %c0_37 = arith.constant 0 : index
    %c0_38 = arith.constant 0 : index
    %64 = vector.load %arg9[%c1_36, %c0_37, %c0_38] : memref<4x8x1xf32, #tpu.memory_space<vmem>>, vector<1x8x1xf32>
    %65 = vector.shape_cast %64 : vector<1x8x1xf32> to vector<8x1xf32>
    %66 = vector.shape_cast %63 : vector<8x1xf32> to vector<1x8x1xf32>
    tpu.vector_store %arg9[%c1_36, %c0_37, %c0_38], %66 {strides = array<i32>} : memref<4x8x1xf32, #tpu.memory_space<vmem>>, vector<1x8x1xf32>,
    %c1_39 = arith.constant 1 : index
    %c0_40 = arith.constant 0 : index
    %c0_41 = arith.constant 0 : index
    %67 = vector.load %arg10[%c1_39, %c0_40, %c0_41] : memref<4x8x32xf32, #tpu.memory_space<vmem>>, vector<1x8x32xf32>
    %68 = vector.shape_cast %67 : vector<1x8x32xf32> to vector<8x32xf32>
    %69 = vector.broadcast %54 : vector<8x1xf32> to vector<8x32xf32>
    %70 = arith.mulf %69, %68 : vector<8x32xf32>
    %71 = arith.truncf %57 : vector<8x8xf32> to vector<8x8xbf16>
    %cst_42 = arith.constant dense<0.000000e+00> : vector<8x32xf32>
    %72 = tpu.matmul %71, %46, %cst_42 {dimension_numbers = #tpu.dot_dimension_numbers<[1], [0], [0], [1], [0, 0, 1, 1], [], []>} : vector<8x8xbf16>, vector<8x32xbf16>, vector<8x32xf32> -> vector<8x32xf32>
    %73 = arith.addf %70, %72 : vector<8x32xf32>
    %c1_43 = arith.constant 1 : index
    %c0_44 = arith.constant 0 : index
    %c0_45 = arith.constant 0 : index
    %74 = vector.load %arg10[%c1_43, %c0_44, %c0_45] : memref<4x8x32xf32, #tpu.memory_space<vmem>>, vector<1x8x32xf32>
    %75 = vector.shape_cast %74 : vector<1x8x32xf32> to vector<8x32xf32>
    %76 = vector.shape_cast %73 : vector<8x32xf32> to vector<1x8x32xf32>
    tpu.vector_store %arg10[%c1_43, %c0_44, %c0_45], %76 {strides = array<i32>} : memref<4x8x32xf32, #tpu.memory_space<vmem>>, vector<1x8x32xf32>,
    %c1_46 = arith.constant 1 : index
    %c0_47 = arith.constant 0 : index
    %c0_48 = arith.constant 0 : index
    %77 = vector.load %arg8[%c1_46, %c0_47, %c0_48] : memref<4x8x1xf32, #tpu.memory_space<vmem>>, vector<1x8x1xf32>
    %78 = vector.shape_cast %77 : vector<1x8x1xf32> to vector<8x1xf32>
    %79 = vector.shape_cast %52 : vector<8x1xf32> to vector<1x8x1xf32>
    tpu.vector_store %arg8[%c1_46, %c0_47, %c0_48], %79 {strides = array<i32>} : memref<4x8x1xf32, #tpu.memory_space<vmem>>, vector<1x8x1xf32>,
    %80 = vector.extract_strided_slice %5 {offsets = [0, 64], sizes = [8, 32], strides = [1, 1]} : vector<8x128xbf16> to vector<8x32xbf16>
    %81 = vector.extract_strided_slice %6 {offsets = [0, 64], sizes = [8, 32], strides = [1, 1]} : vector<8x128xbf16> to vector<8x32xbf16>
    %82 = vector.extract_strided_slice %7 {offsets = [0, 64], sizes = [8, 32], strides = [1, 1]} : vector<8x128xbf16> to vector<8x32xbf16>
    %cst_49 = arith.constant dense<0.000000e+00> : vector<8x8xf32>
    %83 = tpu.matmul %80, %81, %cst_49 {dimension_numbers = #tpu.dot_dimension_numbers<[1], [1], [0], [0], [0, 0, 1, 0], [], []>} : vector<8x32xbf16>, vector<8x32xbf16>, vector<8x8xf32> -> vector<8x8xf32>
    %c2 = arith.constant 2 : index
    %c0_50 = arith.constant 0 : index
    %c0_51 = arith.constant 0 : index
    %84 = vector.load %arg8[%c2, %c0_50, %c0_51] : memref<4x8x1xf32, #tpu.memory_space<vmem>>, vector<1x8x1xf32>
    %85 = vector.shape_cast %84 : vector<1x8x1xf32> to vector<8x1xf32>
    %cst_52 = arith.constant dense<0xFF800000> : vector<8xf32>
    %86 = vector.multi_reduction <maximumf>, %83, %cst_52 [1] : vector<8x8xf32> to vector<8xf32>
    %87 = vector.shape_cast %86 : vector<8xf32> to vector<8x1xf32>
    %88 = arith.maximumf %85, %87 : vector<8x1xf32>
    %89 = arith.subf %85, %88 : vector<8x1xf32>
    %90 = math.exp %89 : vector<8x1xf32>
    %91 = vector.broadcast %88 : vector<8x1xf32> to vector<8x8xf32>
    %92 = arith.subf %83, %91 : vector<8x8xf32>
    %93 = math.exp %92 : vector<8x8xf32>
    %c2_53 = arith.constant 2 : index
    %c0_54 = arith.constant 0 : index
    %c0_55 = arith.constant 0 : index
    %94 = vector.load %arg9[%c2_53, %c0_54, %c0_55] : memref<4x8x1xf32, #tpu.memory_space<vmem>>, vector<1x8x1xf32>
    %95 = vector.shape_cast %94 : vector<1x8x1xf32> to vector<8x1xf32>
    %96 = arith.mulf %90, %95 : vector<8x1xf32>
    %cst_56 = arith.constant dense<0.000000e+00> : vector<8xf32>
    %97 = vector.multi_reduction <add>, %93, %cst_56 [1] : vector<8x8xf32> to vector<8xf32>
    %98 = vector.shape_cast %97 : vector<8xf32> to vector<8x1xf32>
    %99 = arith.addf %96, %98 : vector<8x1xf32>
    %c2_57 = arith.constant 2 : index
    %c0_58 = arith.constant 0 : index
    %c0_59 = arith.constant 0 : index
    %100 = vector.load %arg9[%c2_57, %c0_58, %c0_59] : memref<4x8x1xf32, #tpu.memory_space<vmem>>, vector<1x8x1xf32>
    %101 = vector.shape_cast %100 : vector<1x8x1xf32> to vector<8x1xf32>
    %102 = vector.shape_cast %99 : vector<8x1xf32> to vector<1x8x1xf32>
    tpu.vector_store %arg9[%c2_57, %c0_58, %c0_59], %102 {strides = array<i32>} : memref<4x8x1xf32, #tpu.memory_space<vmem>>, vector<1x8x1xf32>,
    %c2_60 = arith.constant 2 : index
    %c0_61 = arith.constant 0 : index
    %c0_62 = arith.constant 0 : index
    %103 = vector.load %arg10[%c2_60, %c0_61, %c0_62] : memref<4x8x32xf32, #tpu.memory_space<vmem>>, vector<1x8x32xf32>
    %104 = vector.shape_cast %103 : vector<1x8x32xf32> to vector<8x32xf32>
    %105 = vector.broadcast %90 : vector<8x1xf32> to vector<8x32xf32>
    %106 = arith.mulf %105, %104 : vector<8x32xf32>
    %107 = arith.truncf %93 : vector<8x8xf32> to vector<8x8xbf16>
    %cst_63 = arith.constant dense<0.000000e+00> : vector<8x32xf32>
    %108 = tpu.matmul %107, %82, %cst_63 {dimension_numbers = #tpu.dot_dimension_numbers<[1], [0], [0], [1], [0, 0, 1, 1], [], []>} : vector<8x8xbf16>, vector<8x32xbf16>, vector<8x32xf32> -> vector<8x32xf32>
    %109 = arith.addf %106, %108 : vector<8x32xf32>
    %c2_64 = arith.constant 2 : index
    %c0_65 = arith.constant 0 : index
    %c0_66 = arith.constant 0 : index
    %110 = vector.load %arg10[%c2_64, %c0_65, %c0_66] : memref<4x8x32xf32, #tpu.memory_space<vmem>>, vector<1x8x32xf32>
    %111 = vector.shape_cast %110 : vector<1x8x32xf32> to vector<8x32xf32>
    %112 = vector.shape_cast %109 : vector<8x32xf32> to vector<1x8x32xf32>
    tpu.vector_store %arg10[%c2_64, %c0_65, %c0_66], %112 {strides = array<i32>} : memref<4x8x32xf32, #tpu.memory_space<vmem>>, vector<1x8x32xf32>,
    %c2_67 = arith.constant 2 : index
    %c0_68 = arith.constant 0 : index
    %c0_69 = arith.constant 0 : index
    %113 = vector.load %arg8[%c2_67, %c0_68, %c0_69] : memref<4x8x1xf32, #tpu.memory_space<vmem>>, vector<1x8x1xf32>
    %114 = vector.shape_cast %113 : vector<1x8x1xf32> to vector<8x1xf32>
    %115 = vector.shape_cast %88 : vector<8x1xf32> to vector<1x8x1xf32>
    tpu.vector_store %arg8[%c2_67, %c0_68, %c0_69], %115 {strides = array<i32>} : memref<4x8x1xf32, #tpu.memory_space<vmem>>, vector<1x8x1xf32>,
    %116 = vector.extract_strided_slice %5 {offsets = [0, 96], sizes = [8, 32], strides = [1, 1]} : vector<8x128xbf16> to vector<8x32xbf16>
    %117 = vector.extract_strided_slice %6 {offsets = [0, 96], sizes = [8, 32], strides = [1, 1]} : vector<8x128xbf16> to vector<8x32xbf16>
    %118 = vector.extract_strided_slice %7 {offsets = [0, 96], sizes = [8, 32], strides = [1, 1]} : vector<8x128xbf16> to vector<8x32xbf16>
    %cst_70 = arith.constant dense<0.000000e+00> : vector<8x8xf32>
    %119 = tpu.matmul %116, %117, %cst_70 {dimension_numbers = #tpu.dot_dimension_numbers<[1], [1], [0], [0], [0, 0, 1, 0], [], []>} : vector<8x32xbf16>, vector<8x32xbf16>, vector<8x8xf32> -> vector<8x8xf32>
    %c3 = arith.constant 3 : index
    %c0_71 = arith.constant 0 : index
    %c0_72 = arith.constant 0 : index
    %120 = vector.load %arg8[%c3, %c0_71, %c0_72] : memref<4x8x1xf32, #tpu.memory_space<vmem>>, vector<1x8x1xf32>
    %121 = vector.shape_cast %120 : vector<1x8x1xf32> to vector<8x1xf32>
    %cst_73 = arith.constant dense<0xFF800000> : vector<8xf32>
    %122 = vector.multi_reduction <maximumf>, %119, %cst_73 [1] : vector<8x8xf32> to vector<8xf32>
    %123 = vector.shape_cast %122 : vector<8xf32> to vector<8x1xf32>
    %124 = arith.maximumf %121, %123 : vector<8x1xf32>
    %125 = arith.subf %121, %124 : vector<8x1xf32>
    %126 = math.exp %125 : vector<8x1xf32>
    %127 = vector.broadcast %124 : vector<8x1xf32> to vector<8x8xf32>
    %128 = arith.subf %119, %127 : vector<8x8xf32>
    %129 = math.exp %128 : vector<8x8xf32>
    %c3_74 = arith.constant 3 : index
    %c0_75 = arith.constant 0 : index
    %c0_76 = arith.constant 0 : index
    %130 = vector.load %arg9[%c3_74, %c0_75, %c0_76] : memref<4x8x1xf32, #tpu.memory_space<vmem>>, vector<1x8x1xf32>
    %131 = vector.shape_cast %130 : vector<1x8x1xf32> to vector<8x1xf32>
    %132 = arith.mulf %126, %131 : vector<8x1xf32>
    %cst_77 = arith.constant dense<0.000000e+00> : vector<8xf32>
    %133 = vector.multi_reduction <add>, %129, %cst_77 [1] : vector<8x8xf32> to vector<8xf32>
    %134 = vector.shape_cast %133 : vector<8xf32> to vector<8x1xf32>
    %135 = arith.addf %132, %134 : vector<8x1xf32>
    %c3_78 = arith.constant 3 : index
    %c0_79 = arith.constant 0 : index
    %c0_80 = arith.constant 0 : index
    %136 = vector.load %arg9[%c3_78, %c0_79, %c0_80] : memref<4x8x1xf32, #tpu.memory_space<vmem>>, vector<1x8x1xf32>
    %137 = vector.shape_cast %136 : vector<1x8x1xf32> to vector<8x1xf32>
    %138 = vector.shape_cast %135 : vector<8x1xf32> to vector<1x8x1xf32>
    tpu.vector_store %arg9[%c3_78, %c0_79, %c0_80], %138 {strides = array<i32>} : memref<4x8x1xf32, #tpu.memory_space<vmem>>, vector<1x8x1xf32>,
    %c3_81 = arith.constant 3 : index
    %c0_82 = arith.constant 0 : index
    %c0_83 = arith.constant 0 : index
    %139 = vector.load %arg10[%c3_81, %c0_82, %c0_83] : memref<4x8x32xf32, #tpu.memory_space<vmem>>, vector<1x8x32xf32>
    %140 = vector.shape_cast %139 : vector<1x8x32xf32> to vector<8x32xf32>
    %141 = vector.broadcast %126 : vector<8x1xf32> to vector<8x32xf32>
    %142 = arith.mulf %141, %140 : vector<8x32xf32>
    %143 = arith.truncf %129 : vector<8x8xf32> to vector<8x8xbf16>
    %cst_84 = arith.constant dense<0.000000e+00> : vector<8x32xf32>
    %144 = tpu.matmul %143, %118, %cst_84 {dimension_numbers = #tpu.dot_dimension_numbers<[1], [0], [0], [1], [0, 0, 1, 1], [], []>} : vector<8x8xbf16>, vector<8x32xbf16>, vector<8x32xf32> -> vector<8x32xf32>
    %145 = arith.addf %142, %144 : vector<8x32xf32>
    %c3_85 = arith.constant 3 : index
    %c0_86 = arith.constant 0 : index
    %c0_87 = arith.constant 0 : index
    %146 = vector.load %arg10[%c3_85, %c0_86, %c0_87] : memref<4x8x32xf32, #tpu.memory_space<vmem>>, vector<1x8x32xf32>
    %147 = vector.shape_cast %146 : vector<1x8x32xf32> to vector<8x32xf32>
    %148 = vector.shape_cast %145 : vector<8x32xf32> to vector<1x8x32xf32>
    tpu.vector_store %arg10[%c3_85, %c0_86, %c0_87], %148 {strides = array<i32>} : memref<4x8x32xf32, #tpu.memory_space<vmem>>, vector<1x8x32xf32>,
    %c3_88 = arith.constant 3 : index
    %c0_89 = arith.constant 0 : index
    %c0_90 = arith.constant 0 : index
    %149 = vector.load %arg8[%c3_88, %c0_89, %c0_90] : memref<4x8x1xf32, #tpu.memory_space<vmem>>, vector<1x8x1xf32>
    %150 = vector.shape_cast %149 : vector<1x8x1xf32> to vector<8x1xf32>
    %151 = vector.shape_cast %124 : vector<8x1xf32> to vector<1x8x1xf32>
    tpu.vector_store %arg8[%c3_88, %c0_89, %c0_90], %151 {strides = array<i32>} : memref<4x8x1xf32, #tpu.memory_space<vmem>>, vector<1x8x1xf32>,
    %c0_i32_91 = arith.constant 0 : i32
    %152 = arith.cmpi eq, %arg3, %c0_i32_91 : i32
    %153 = arith.extui %152 : i1 to i32
    %c0_i32_92 = arith.constant 0 : i32
    %154 = arith.cmpi ne, %153, %c0_i32_92 : i32
    scf.if %154 {
      %c0_93 = arith.constant 0 : index
      %c0_94 = arith.constant 0 : index
      %c0_95 = arith.constant 0 : index
      %155 = vector.load %arg9[%c0_93, %c0_94, %c0_95] : memref<4x8x1xf32, #tpu.memory_space<vmem>>, vector<4x8x1xf32>
      %156 = tpu.reciprocal %155 {approx = true} : vector<4x8x1xf32> -> vector<4x8x1xf32>
      %c0_96 = arith.constant 0 : index
      %c0_97 = arith.constant 0 : index
      %c0_98 = arith.constant 0 : index
      %157 = vector.load %arg10[%c0_96, %c0_97, %c0_98] : memref<4x8x32xf32, #tpu.memory_space<vmem>>, vector<1x8x32xf32>
      %158 = vector.shape_cast %157 : vector<1x8x32xf32> to vector<8x32xf32>
      %159 = vector.extract_strided_slice %156 {offsets = [0, 0, 0], sizes = [1, 8, 1], strides = [1, 1, 1]} : vector<4x8x1xf32> to vector<1x8x1xf32>
      %160 = vector.shape_cast %159 : vector<1x8x1xf32> to vector<8x1xf32>
      %161 = vector.broadcast %160 : vector<8x1xf32> to vector<8x32xf32>
      %162 = arith.mulf %158, %161 : vector<8x32xf32>
      %c1_99 = arith.constant 1 : index
      %c0_100 = arith.constant 0 : index
      %c0_101 = arith.constant 0 : index
      %163 = vector.load %arg10[%c1_99, %c0_100, %c0_101] : memref<4x8x32xf32, #tpu.memory_space<vmem>>, vector<1x8x32xf32>
      %164 = vector.shape_cast %163 : vector<1x8x32xf32> to vector<8x32xf32>
      %165 = vector.extract_strided_slice %156 {offsets = [1, 0, 0], sizes = [1, 8, 1], strides = [1, 1, 1]} : vector<4x8x1xf32> to vector<1x8x1xf32>
      %166 = vector.shape_cast %165 : vector<1x8x1xf32> to vector<8x1xf32>
      %167 = vector.broadcast %166 : vector<8x1xf32> to vector<8x32xf32>
      %168 = arith.mulf %164, %167 : vector<8x32xf32>
      %c2_102 = arith.constant 2 : index
      %c0_103 = arith.constant 0 : index
      %c0_104 = arith.constant 0 : index
      %169 = vector.load %arg10[%c2_102, %c0_103, %c0_104] : memref<4x8x32xf32, #tpu.memory_space<vmem>>, vector<1x8x32xf32>
      %170 = vector.shape_cast %169 : vector<1x8x32xf32> to vector<8x32xf32>
      %171 = vector.extract_strided_slice %156 {offsets = [2, 0, 0], sizes = [1, 8, 1], strides = [1, 1, 1]} : vector<4x8x1xf32> to vector<1x8x1xf32>
      %172 = vector.shape_cast %171 : vector<1x8x1xf32> to vector<8x1xf32>
      %173 = vector.broadcast %172 : vector<8x1xf32> to vector<8x32xf32>
      %174 = arith.mulf %170, %173 : vector<8x32xf32>
      %c3_105 = arith.constant 3 : index
      %c0_106 = arith.constant 0 : index
      %c0_107 = arith.constant 0 : index
      %175 = vector.load %arg10[%c3_105, %c0_106, %c0_107] : memref<4x8x32xf32, #tpu.memory_space<vmem>>, vector<1x8x32xf32>
      %176 = vector.shape_cast %175 : vector<1x8x32xf32> to vector<8x32xf32>
      %177 = vector.extract_strided_slice %156 {offsets = [3, 0, 0], sizes = [1, 8, 1], strides = [1, 1, 1]} : vector<4x8x1xf32> to vector<1x8x1xf32>
      %178 = vector.shape_cast %177 : vector<1x8x1xf32> to vector<8x1xf32>
      %179 = vector.broadcast %178 : vector<8x1xf32> to vector<8x32xf32>
      %180 = arith.mulf %176, %179 : vector<8x32xf32>
      %181 = tpu.concatenate %162, %168, %174, %180 in 1 : vector<8x32xf32>, vector<8x32xf32>, vector<8x32xf32>, vector<8x32xf32> -> vector<8x128xf32>
      %182 = arith.truncf %181 : vector<8x128xf32> to vector<8x128xbf16>
      %c0_108 = arith.constant 0 : index
      %c0_109 = arith.constant 0 : index
      %183 = vector.load %arg7[%c0_108, %c0_109] : memref<8x128xbf16, #tpu.memory_space<vmem>>, vector<8x128xbf16>
      tpu.vector_store %arg7[%c0_108, %c0_109], %182 {strides = array<i32>} : memref<8x128xbf16, #tpu.memory_space<vmem>>, vector<8x128xbf16>,
    } else {
    }
    return
  }
  func.func @transform_0(%arg0: i32, %arg1: i32, %arg2: i32, %arg3: i32) -> (i32, i32) {
    %c1_i32 = arith.constant 1 : i32
    %0 = arith.muli %arg0, %c1_i32 : i32
    %1 = arith.addi %0, %arg2 : i32
    %c0_i32 = arith.constant 0 : i32
    return %1, %arg1 : i32, i32
  }
  func.func @transform_1(%arg0: i32, %arg1: i32, %arg2: i32, %arg3: i32) -> (i32, i32) {
    %c1_i32 = arith.constant 1 : i32
    %0 = arith.muli %arg0, %c1_i32 : i32
    %1 = arith.addi %0, %arg3 : i32
    %c1_i32_0 = arith.constant 1 : i32
    %2 = arith.addi %c1_i32_0, %arg1 : i32
    %c0_i32 = arith.constant 0 : i32
    return %1, %2 : i32, i32
  }
  func.func @transform_2(%arg0: i32, %arg1: i32, %arg2: i32, %arg3: i32) -> (i32, i32) {
    %c1_i32 = arith.constant 1 : i32
    %0 = arith.muli %arg0, %c1_i32 : i32
    %1 = arith.addi %0, %arg3 : i32
    %c2_i32 = arith.constant 2 : i32
    %2 = arith.addi %c2_i32, %arg1 : i32
    %c0_i32 = arith.constant 0 : i32
    return %1, %2 : i32, i32
  }
  func.func @transform_3(%arg0: i32, %arg1: i32, %arg2: i32, %arg3: i32) -> (i32, i32) {
    %c1_i32 = arith.constant 1 : i32
    %0 = arith.muli %arg0, %c1_i32 : i32
    %1 = arith.addi %0, %arg2 : i32
    %c0_i32 = arith.constant 0 : i32
    return %1, %arg1 : i32, i32
  }
}

</mosaic_0001>

<llo_original>
// kernel: attention_forward.5
$region0: #{attention_forward.5}
  #allocation0 [shape = 'u32[]', space=smem, size = 0x4, offset = 0x4, fixed_abs, tag = 'smem constant byte address 0x4 - core index']
  #allocation1 [shape = 'u32[144,128]{1,0:T(1,128)}', space=vmem, size = 0x12000, scoped, tag = 'internal scratch']
  #allocation2 [shape = 'f32[16,32]{1,0:T(8,128)}', space=vmem, size = 0x2000, scoped, tag = 'scratch operand']
  %s0 = inlined_call_operand.vmem [shape: bf16[16,128], index: 0, kind: input, shape index: {}]
  %s1 = inlined_call_operand.vmem [shape: bf16[128,32], index: 1, kind: input, shape index: {}]
  %s2 = inlined_call_operand.vmem [shape: f32[1,32], index: 2, kind: input, shape index: {}]
  %s3 = inlined_call_operand.hbm [shape: f32[16,32], index: 3, kind: output, shape index: {}]
  %s4 = sld [smem:[#allocation0]]
  $region30: #{attention_forward.5} parent=0
    _
  %s6 = ssub.s32 1, %s4
  %s7 = scalar_select 0, %s6, %s4
  $region1: #{attention_forward.5} parent=0
    #allocation3 [shape = 'u8[8192]{0}', space=vmem, size = 0x2000, scoped, tag = 'output window, operand 0, single buffered']
    #allocation4 [shape = 's32[1]{0}', space=sflag, size = 0x4, scoped, tag = 'scoped memory for attention_forward.5']
    %8 = vsyncpa [#allocation4], 0
    // Predicated region
    $region2: #{attention_forward.5} parent=1 // pred_check
      _
    $region3: #{attention_forward.5} parent=1 // pred_check_branch
      %10 = sbr.rel (0) target = $region5
    $region4: #{attention_forward.5} parent=1 // pred_region
      _
    $region5: #{attention_forward.5} parent=1 // pred_fallthru
      _
    // Predicated region
    $region6: #{attention_forward.5} parent=1 // pred_check
      _
    $region7: #{attention_forward.5} parent=1 // pred_check_branch
      %12 = sbr.rel (0) target = $region9
    $region8: #{attention_forward.5} parent=1 // pred_region
      _
    $region9: #{attention_forward.5} parent=1 // pred_fallthru
      _
    // Predicated region
    $region10: #{attention_forward.5} parent=1 // pred_check
      _
    $region11: #{attention_forward.5} parent=1 // pred_check_branch
      %14 = sbr.rel (0) target = $region13
    $region12: #{attention_forward.5} parent=1 // pred_region
      _
    $region13: #{attention_forward.5} parent=1 // pred_fallthru
      _
    %p16 = scmp.eq.s32.totalorder 0, 0
    // Predicated region
    $region14: #{attention_forward.5} parent=1 // pred_check
      %p17 = pneg %p16
    $region15: #{attention_forward.5} parent=1 // pred_check_branch
      %19 = sbr.rel (%p17) target = $region17
    $region16: #{attention_forward.5} parent=1 // pred_region
      %v20 = vld [vmem:[%s2] sm:$0x1]
      %v22 = vlaneseq
      %v23 = vshrl.u32 %v22, 7
      %v24 = vsub.s32 0, %v23
      %v25 = vrot.slane %v20, %v24
      %vm27 = vcmask 261120
      %28 = vst.msk [vmem:[#allocation2] sm:$0xff] %vm27, %v25
      %29 = vst.msk [vmem:[#allocation2 + $0x8] sm:$0xff] %vm27, %v25
    $region17: #{attention_forward.5} parent=1 // pred_fallthru
      _
    %v30 = vld [vmem:[#allocation2] sm:$0xff]
    %v31 = vld [vmem:[#allocation2 + $0x8] sm:$0xff]
    %v32 = vld [vmem:[%s0] sm:$0xf]
    %v33 = vld [vmem:[%s0 + $0x4] sm:$0xf]
    %v34 = vld [vmem:[%s1] sm:$0xf]
    %v35 = vld [vmem:[%s1 + $0x4] sm:$0xf]
    %v36 = vld [vmem:[%s1 + $0x8] sm:$0xf]
    %v37 = vld [vmem:[%s1 + $0xc] sm:$0xf]
    %v38 = vld [vmem:[%s1 + $0x10] sm:$0xf]
    %v39 = vld [vmem:[%s1 + $0x14] sm:$0xf]
    %v40 = vld [vmem:[%s1 + $0x18] sm:$0xf]
    %v41 = vld [vmem:[%s1 + $0x1c] sm:$0xf]
    %v42 = vld [vmem:[%s1 + $0x20] sm:$0xf]
    %v43 = vld [vmem:[%s1 + $0x24] sm:$0xf]
    %v44 = vld [vmem:[%s1 + $0x28] sm:$0xf]
    %v45 = vld [vmem:[%s1 + $0x2c] sm:$0xf]
    %v46 = vld [vmem:[%s1 + $0x30] sm:$0xf]
    %v47 = vld [vmem:[%s1 + $0x34] sm:$0xf]
    %v48 = vld [vmem:[%s1 + $0x38] sm:$0xf]
    %v49 = vld [vmem:[%s1 + $0x3c] sm:$0xf]
    %v52 = vunpack.c.l.b16 %v32
    %v53 = vunpack.c.l.b16 %v33
    %v54 = vpack.c.b16 %v53, %v52
    %v72 = vunpack.c.l.b16 %v34
    %v73 = vunpack.c.l.b16 %v35
    %v74 = vunpack.c.l.b16 %v36
    %v75 = vunpack.c.l.b16 %v37
    %v76 = vunpack.c.l.b16 %v38
    %v77 = vunpack.c.l.b16 %v39
    %v78 = vunpack.c.l.b16 %v40
    %v79 = vunpack.c.l.b16 %v41
    %v80 = vunpack.c.l.b16 %v42
    %v81 = vunpack.c.l.b16 %v43
    %v82 = vunpack.c.l.b16 %v44
    %v83 = vunpack.c.l.b16 %v45
    %v84 = vunpack.c.l.b16 %v46
    %v85 = vunpack.c.l.b16 %v47
    %v86 = vunpack.c.l.b16 %v48
    %v87 = vunpack.c.l.b16 %v49
    %v88 = vpack.c.b16 %v73, %v72
    %v89 = vpack.c.b16 %v75, %v74
    %v90 = vpack.c.b16 %v77, %v76
    %v91 = vpack.c.b16 %v79, %v78
    %v92 = vpack.c.b16 %v81, %v80
    %v93 = vpack.c.b16 %v83, %v82
    %v94 = vpack.c.b16 %v85, %v84
    %v95 = vpack.c.b16 %v87, %v86
    %104 = vmatprep.subr.bf16.mxu0 0
    %105 = vmatpush1.bf16.msra.mxu0 %v95
    %106 = vmatprep.subr.bf16.mxu0 0
    %107 = vmatpush1.bf16.msra.mxu0 %v94
    %108 = vmatprep.subr.bf16.mxu0 0
    %109 = vmatpush1.bf16.msra.mxu0 %v93
    %110 = vmatprep.subr.bf16.mxu0 0
    %111 = vmatpush1.bf16.msra.mxu0 %v92
    %112 = vmatprep.subr.bf16.mxu0 0
    %113 = vmatpush1.bf16.msra.mxu0 %v91
    %114 = vmatprep.subr.bf16.mxu0 0
    %115 = vmatpush1.bf16.msra.mxu0 %v90
    %116 = vmatprep.subr.bf16.mxu0 0
    %117 = vmatpush1.bf16.msra.mxu0 %v89
    %118 = vmatprep.subr.bf16.mxu0 0
    %119 = vmatpush1.bf16.msra.mxu0 %v88
    %120 = vmatprep.subr.bf16.mxu0 0
    %121 = vmatpush2.bf16.msra.mxu0 0
    %122 = vmatprep.subr.bf16.mxu0 0
    %123 = vmatpush2.bf16.msra.mxu0 0
    %124 = vmatprep.subr.bf16.mxu0 0
    %125 = vmatpush2.bf16.msra.mxu0 0
    %126 = vmatprep.subr.bf16.mxu0 0
    %127 = vmatpush2.bf16.msra.mxu0 0
    %128 = vmatprep.subr.bf16.mxu0 0
    %129 = vmatpush2.bf16.msra.mxu0 0
    %130 = vmatprep.subr.bf16.mxu0 0
    %131 = vmatpush2.bf16.msra.mxu0 0
    %132 = vmatprep.subr.bf16.mxu0 0
    %133 = vmatpush2.bf16.msra.mxu0 0
    %134 = vmatprep.subr.bf16.mxu0 0
    %135 = vmatpush2.bf16.msra.mxu0 0
    %136 = vmatprep.mubr.bf16.mxu0 0
    %137 = vmatmul.mubr.bf16.gmra.mxu0 %v54
    %v138 = vpop.f32.mrf.mxu0
    %v139 = vadd.f32 0.0, %v138
    %v140 = vpop.f32.mrf.mxu0
    %v141 = vpop.f32.mrf.mxu0
    %v142 = vadd.f32 0.0, %v141
    %v143 = vpop.f32.mrf.mxu0
    %144 = vdwg.mxu0
    %v145 = vadd.f32 %v30, %v139
    %v146 = vadd.f32 %v31, %v142
    %vm147 = vcmask 261120
    %148 = vst.msk [vmem:[#allocation2] sm:$0xff] %vm147, %v145
    %149 = vst.msk [vmem:[#allocation2 + $0x8] sm:$0xff] %vm147, %v146
    // Predicated region
    $region18: #{attention_forward.5} parent=1 // pred_check
      %p150 = pneg %p16
    $region19: #{attention_forward.5} parent=1 // pred_check_branch
      %152 = sbr.rel (%p150) target = $region21
    $region20: #{attention_forward.5} parent=1 // pred_region
      %v153 = vld [vmem:[#allocation2] sm:$0xff]
      %v154 = vld [vmem:[#allocation2 + $0x8] sm:$0xff]
      %155 = vst.msk [vmem:[#allocation3] sm:$0xff] %vm147, %v153
      %156 = vst.msk [vmem:[#allocation3 + $0x8] sm:$0xff] %vm147, %v154
    $region21: #{attention_forward.5} parent=1 // pred_fallthru
      _
    // Predicated region
    $region22: #{attention_forward.5} parent=1 // pred_check
      _
    $region23: #{attention_forward.5} parent=1 // pred_check_branch
      %158 = sbr.rel (0) target = $region25
    $region24: #{attention_forward.5} parent=1 // pred_region
      %s160 = ssub.s32 256, 256
      %161 = vsyncadd [#allocation4], %s160
      %s162 = sshll.u32 [#allocation3], 4
      %s163 = int_to_ptr.vmem [resolvable:$true] %s162
      %168 = dma.vmem_to_hbm [thread:$0]  %s163, 256, %s3, [#allocation4], 128, 128, 8
    $region25: #{attention_forward.5} parent=1 // pred_fallthru
      _
    // Predicated region
    $region26: #{attention_forward.5} parent=1 // pred_check
      _
    $region27: #{attention_forward.5} parent=1 // pred_check_branch
      %170 = sbr.rel (0) target = $region29
    $region28: #{attention_forward.5} parent=1 // pred_region
      %171 = dma.done [#allocation4], 256
    $region29: #{attention_forward.5} parent=1 // pred_fallthru
      _
    %172 = vsyncpa [#allocation4], 1

// kernel: attention_forward.3
$region0: #{attention_forward.3}
  #allocation0 [shape = 'u32[]', space=smem, size = 0x4, offset = 0x4, fixed_abs, tag = 'smem constant byte address 0x4 - core index']
  #allocation1 [shape = 'u32[144,128]{1,0:T(1,128)}', space=vmem, size = 0x12000, scoped, tag = 'internal scratch']
  #allocation2 [shape = 'f32[16,128]{1,0:T(8,128)}', space=vmem, size = 0x2000, scoped, tag = 'scratch operand']
  %s0 = inlined_call_operand.hbm [shape: f32[16,32], index: 0, kind: input, shape index: {}]
  %s1 = inlined_call_operand.hbm [shape: bf16[32,384], index: 1, kind: input, shape index: {}]
  %s2 = inlined_call_operand.vmem [shape: bf16[16,384], index: 2, kind: output, shape index: {}]
  %s3 = sld [smem:[#allocation0]]
  $region94: #{attention_forward.3} parent=0
    _
  %s5 = ssub.s32 1, %s3
  %s6 = scalar_select 0, %s5, %s3
  $region1: #{attention_forward.3} parent=0
    #allocation3 [shape = 'u8[8192]{0}', space=vmem, size = 0x2000, scoped, tag = 'input window, operand 0, single buffered']
    #allocation4 [shape = 's32[2]{0}', space=sflag, size = 0x8, scoped, tag = 'scoped memory for attention_forward.3']
    #allocation5 [shape = 'u8[16384]{0}', space=vmem, size = 0x4000, scoped, tag = 'input window, operand 1']
    #allocation6 [shape = 's32[2]{0}', space=sflag, size = 0x8, scoped, tag = 'scoped memory for attention_forward.3']
    #allocation7 [shape = 'u8[8192]{0}', space=vmem, size = 0x2000, scoped, tag = 'output window, operand 0']
    %7 = vsyncpa [#allocation4], 0
    %8 = vsyncpa [#allocation6], 0
    %s9 = scalar_lea.sflag [#allocation6], 1
    %10 = vsyncpa %s9, 0
    loop: start=0, step=1, limit=5
    $region2: #{attention_forward.3} parent=1 // loop_pre_header
      _
    $region3: #{attention_forward.3} parent=1 // loop_header
      %s12 = sphi 0, %s16
      %p13 = scmp.ge.s32.totalorder %s12, 5
      %s19 = sphi 0, %s38
      %s20 = sphi 0, %s34
      %s21 = sphi 0, %s30
      %s22 = sphi 0, %s19
      %s23 = sphi 0, %s20
      %s24 = sphi 0, %s21
      %s25 = sphi 0, %s22
      %s26 = sphi 0, %s23
      %s27 = sphi 0, %s24
      %s43 = sphi 0, %s45
      %s46 = sphi 0, %s43
      %s47 = sphi 0, %s46
      %s63 = sphi 0, %s47
      %s71 = sphi 0, %s73
      %s74 = sphi 0, %s71
      %s75 = sphi 0, %s74
      %s91 = sphi 0, %s75
      %s99 = sphi 0, %s101
      %s102 = sphi 0, %s99
      %s103 = sphi 0, %s102
      %s119 = sphi 0, %s103
    $region4: #{attention_forward.3} parent=1 // loop_header_branch
      %15 = sbr.rel (%p13) target = $region8
    $region5: #{attention_forward.3} parent=1 // loop_body
      %s17 = ssub.s32 %s12, 1
      %s18 = ssub.s32 %s12, 2
      %s28 = sadd.s32 1, %s21
      %p29 = scmp.ge.s32.totalorder %s28, 1
      %s30 = scalar_select %p29, 0, %s28
      %s31 = sadd.s32 1, %s20
      %s32 = scalar_select %p29, %s31, %s20
      %p33 = scmp.ge.s32.totalorder %s32, 3
      %s34 = scalar_select %p33, 0, %s32
      %s35 = sadd.s32 1, %s19
      %s36 = scalar_select %p33, %s35, %s19
      %p37 = scmp.ge.s32.totalorder %s36, 1
      %s38 = scalar_select %p37, 0, %s36
      %s39 = ssub.s32 %s19, %s38
      %s40 = ssub.s32 %s21, %s30
      %s41 = sor.u32 %s39, %s40
      %p42 = scmp.eq.s32.totalorder %s41, 0
      %s44 = sadd.s32 %s43, 1
      %s45 = scalar_select %p42, %s43, %s44
      %p48 = pneg %p42
      %p49 = scmp.eq.s32.totalorder %s12, 2
      %p50 = por %p48, %p49
      %p51 = scmp.ne.s32.totalorder %s43, %s46
      %p52 = scmp.eq.s32.totalorder %s12, 0
      %p53 = por %p51, %p52
      %p54 = scmp.ne.s32.totalorder %s43, %s46
      %p55 = scmp.eq.s32.totalorder %s17, 2
      %p56 = por %p54, %p55
      %p57 = scmp.ne.s32.totalorder %s46, %s47
      %p58 = scmp.eq.s32.totalorder %s17, 0
      %p59 = por %p57, %p58
      %p60 = scmp.ne.s32.totalorder %s46, %s47
      %p61 = scmp.eq.s32.totalorder %s18, 2
      %p62 = por %p60, %p61
      %p64 = scmp.ne.s32.totalorder %s47, %s63
      %p65 = scmp.eq.s32.totalorder %s18, 0
      %p66 = por %p64, %p65
      %s67 = ssub.s32 %s21, %s30
      %s68 = ssub.s32 %s20, %s34
      %s69 = sor.u32 %s67, %s68
      %p70 = scmp.eq.s32.totalorder %s69, 0
      %s72 = sadd.s32 %s71, 1
      %s73 = scalar_select %p70, %s71, %s72
      %p76 = pneg %p70
      %p77 = scmp.eq.s32.totalorder %s12, 2
      %p78 = por %p76, %p77
      %p79 = scmp.ne.s32.totalorder %s71, %s74
      %p80 = scmp.eq.s32.totalorder %s12, 0
      %p81 = por %p79, %p80
      %p82 = scmp.ne.s32.totalorder %s71, %s74
      %p83 = scmp.eq.s32.totalorder %s17, 2
      %p84 = por %p82, %p83
      %p85 = scmp.ne.s32.totalorder %s74, %s75
      %p86 = scmp.eq.s32.totalorder %s17, 0
      %p87 = por %p85, %p86
      %p88 = scmp.ne.s32.totalorder %s74, %s75
      %p89 = scmp.eq.s32.totalorder %s18, 2
      %p90 = por %p88, %p89
      %p92 = scmp.ne.s32.totalorder %s75, %s91
      %p93 = scmp.eq.s32.totalorder %s18, 0
      %p94 = por %p92, %p93
      %s95 = ssub.s32 %s19, %s38
      %s96 = ssub.s32 %s20, %s34
      %s97 = sor.u32 %s95, %s96
      %p98 = scmp.eq.s32.totalorder %s97, 0
      %s100 = sadd.s32 %s99, 1
      %s101 = scalar_select %p98, %s99, %s100
      %p104 = pneg %p98
      %p105 = scmp.eq.s32.totalorder %s12, 2
      %p106 = por %p104, %p105
      %p107 = scmp.ne.s32.totalorder %s99, %s102
      %p108 = scmp.eq.s32.totalorder %s12, 0
      %p109 = por %p107, %p108
      %p110 = scmp.ne.s32.totalorder %s99, %s102
      %p111 = scmp.eq.s32.totalorder %s17, 2
      %p112 = por %p110, %p111
      %p113 = scmp.ne.s32.totalorder %s102, %s103
      %p114 = scmp.eq.s32.totalorder %s17, 0
      %p115 = por %p113, %p114
      %p116 = scmp.ne.s32.totalorder %s102, %s103
      %p117 = scmp.eq.s32.totalorder %s18, 2
      %p118 = por %p116, %p117
      %p120 = scmp.ne.s32.totalorder %s103, %s119
      %p121 = scmp.eq.s32.totalorder %s18, 0
      %p122 = por %p120, %p121
      %p123 = scmp.le.s32.totalorder 1, %s12
      %p124 = scmp.lt.s32.totalorder %s12, 4
      %p125 = pnand %p123, %p124
      %p126 = pneg %p125
      // Predicated region
      $region9: #{attention_forward.3} parent=5 // pred_check
        _
      $region10: #{attention_forward.3} parent=5 // pred_check_branch
        %128 = sbr.rel (%p125) target = $region12
      $region11: #{attention_forward.3} parent=5 // pred_region
        %s129 = ssub.s32 %s12, 1
        // Predicated region
        $region13: #{attention_forward.3} parent=11 // pred_check
          %p130 = pneg %p59
        $region14: #{attention_forward.3} parent=11 // pred_check_branch
          %132 = sbr.rel (%p130) target = $region16
        $region15: #{attention_forward.3} parent=11 // pred_region
          %s133 = smul.u32 2, %s22
          %s135 = ssub.s32 256, 256
          %136 = vsyncadd [#allocation4], %s135
          %s137 = sadd.s32 %s24, %s133
          %s138 = smul.addr %s137, 128
          %s139 = scalar_lea.hbm %s0, %s138
          %s140 = sshll.u32 [#allocation3], 4
          %s141 = int_to_ptr.vmem [resolvable:$true] %s140
          %146 = dma.hbm_to_vmem [thread:$0]  %s139, 256, %s141, [#allocation4], 128, 128, 8
        $region16: #{attention_forward.3} parent=11 // pred_fallthru
          _
      $region12: #{attention_forward.3} parent=5 // pred_fallthru
        _
      %p147 = scmp.lt.s32.totalorder %s12, 3
      // Predicated region
      $region17: #{attention_forward.3} parent=5 // pred_check
        %p148 = pneg %p147
      $region18: #{attention_forward.3} parent=5 // pred_check_branch
        %150 = sbr.rel (%p148) target = $region20
      $region19: #{attention_forward.3} parent=5 // pred_region
        // Predicated region
        $region21: #{attention_forward.3} parent=19 // pred_check
          %p151 = pneg %p81
        $region22: #{attention_forward.3} parent=19 // pred_check_branch
          %153 = sbr.rel (%p151) target = $region24
        $region23: #{attention_forward.3} parent=19 // pred_region
          %s154 = sand.u32 %s71, 1
          %s155 = scalar_lea.sflag [#allocation6], %s154
          %s156 = sand.u32 %s71, 1
          %s157 = smul.addr %s156, 16
          %s158 = scalar_lea.vmem [#allocation5], %s157
          %s159 = smul.u32 4, %s21
          %s161 = ssub.s32 256, 256
          %162 = vsyncadd %s155, %s161
          %s163 = smul.addr %s159, 3
          %s164 = sadd.s32 %s20, %s163
          %s165 = smul.addr %s164, 64
          %s166 = scalar_lea.hbm %s1, %s165
          %s167 = sshll.u32 %s158, 4
          %s168 = int_to_ptr.vmem [resolvable:$true] %s167
          %173 = dma.hbm_to_vmem [thread:$0]  %s166, 256, %s168, %s155, 192, 64, 4
        $region24: #{attention_forward.3} parent=19 // pred_fallthru
          _
      $region20: #{attention_forward.3} parent=5 // pred_fallthru
        _
      %p174 = scmp.le.s32.totalorder 1, %s12
      %p175 = scmp.lt.s32.totalorder %s12, 4
      %p176 = pnand %p174, %p175
      %p177 = pneg %p176
      // Predicated region
      $region25: #{attention_forward.3} parent=5 // pred_check
        _
      $region26: #{attention_forward.3} parent=5 // pred_check_branch
        %179 = sbr.rel (%p176) target = $region28
      $region27: #{attention_forward.3} parent=5 // pred_region
        %s180 = ssub.s32 %s12, 1
        // Predicated region
        $region29: #{attention_forward.3} parent=27 // pred_check
          %p181 = pneg %p59
        $region30: #{attention_forward.3} parent=27 // pred_check_branch
          %183 = sbr.rel (%p181) target = $region32
        $region31: #{attention_forward.3} parent=27 // pred_region
          %184 = dma.done [#allocation4], 256
        $region32: #{attention_forward.3} parent=27 // pred_fallthru
          _
        %s185 = sand.u32 %s74, 1
        %s186 = scalar_lea.sflag [#allocation6], %s185
        %s187 = sand.u32 %s74, 1
        %s188 = smul.addr %s187, 16
        %s189 = scalar_lea.vmem [#allocation5], %s188
        // Predicated region
        $region33: #{attention_forward.3} parent=27 // pred_check
          %p190 = pneg %p87
        $region34: #{attention_forward.3} parent=27 // pred_check_branch
          %192 = sbr.rel (%p190) target = $region36
        $region35: #{attention_forward.3} parent=27 // pred_region
          %193 = dma.done %s186, 256
        $region36: #{attention_forward.3} parent=27 // pred_fallthru
          _
        %p194 = pneg %p59
        %p195 = pneg %p56
        %s196 = sand.u32 %s74, 1
        %s197 = scalar_lea.sflag [#allocation6], %s196
        %s198 = sand.u32 %s74, 1
        %s199 = smul.addr %s198, 16
        %s200 = scalar_lea.vmem [#allocation5], %s199
        %p201 = pneg %p87
        %p202 = pneg %p84
        %p203 = pneg %p115
        %p204 = pneg %p112
        %s205 = sand.u32 %s102, 1
        %s206 = sand.u32 %s102, 1
        %s207 = smul.addr %s206, 8
        %s208 = scalar_lea.vmem [#allocation7], %s207
        %s209 = smul.u32 2, %s22
        %s210 = smul.u32 4, %s24
        %s211 = smul.u32 2, %s22
        %p213 = scmp.eq.s32.totalorder %s24, 0
        // Predicated region
        $region37: #{attention_forward.3} parent=27 // pred_check
          %p214 = pneg %p213
        $region38: #{attention_forward.3} parent=27 // pred_check_branch
          %216 = sbr.rel (%p214) target = $region40
        $region39: #{attention_forward.3} parent=27 // pred_region
          %217 = vst [vmem:[#allocation2] sm:$0xff] 0.0
          %218 = vst [vmem:[#allocation2 + $0x8] sm:$0xff] 0.0
        $region40: #{attention_forward.3} parent=27 // pred_fallthru
          _
        %v219 = vld [vmem:[#allocation2] sm:$0xff]
        %v220 = vld [vmem:[#allocation2 + $0x8] sm:$0xff]
        %v221 = vld [vmem:[#allocation3] sm:$0xff]
        %v222 = vld [vmem:[#allocation3 + $0x8] sm:$0xff]
        %v223 = vpack.c.bf16 %v222, %v221
        %v224 = vld [vmem:[%s189] sm:$0xf]
        %v225 = vld [vmem:[%s189 + $0x4] sm:$0xf]
        %v226 = vld [vmem:[%s189 + $0x8] sm:$0xf]
        %v227 = vld [vmem:[%s189 + $0xc] sm:$0xf]
        %v232 = vunpack.c.l.b16 %v224
        %v233 = vunpack.c.l.b16 %v225
        %v234 = vunpack.c.l.b16 %v226
        %v235 = vunpack.c.l.b16 %v227
        %v236 = vpack.c.b16 %v233, %v232
        %v237 = vpack.c.b16 %v235, %v234
        %vm240 = vcmask 261120
        %v242 = vsel %vm240, %v223, 0
        %244 = vmatprep.subr.bf16.mxu0 0
        %245 = vmatpush1.bf16.msra.mxu0 0
        %246 = vmatprep.subr.bf16.mxu0 0
        %247 = vmatpush1.bf16.msra.mxu0 0
        %248 = vmatprep.subr.bf16.mxu0 0
        %249 = vmatpush1.bf16.msra.mxu0 0
        %250 = vmatprep.subr.bf16.mxu0 0
        %251 = vmatpush1.bf16.msra.mxu0 0
        %252 = vmatprep.subr.bf16.mxu0 0
        %253 = vmatpush1.bf16.msra.mxu0 0
        %254 = vmatprep.subr.bf16.mxu0 0
        %255 = vmatpush1.bf16.msra.mxu0 0
        %256 = vmatprep.subr.bf16.mxu0 0
        %257 = vmatpush1.bf16.msra.mxu0 %v237
        %258 = vmatprep.subr.bf16.mxu0 0
        %259 = vmatpush1.bf16.msra.mxu0 %v236
        %260 = vmatprep.subr.bf16.mxu0 0
        %261 = vmatpush2.bf16.msra.mxu0 0
        %262 = vmatprep.subr.bf16.mxu0 0
        %263 = vmatpush2.bf16.msra.mxu0 0
        %264 = vmatprep.subr.bf16.mxu0 0
        %265 = vmatpush2.bf16.msra.mxu0 0
        %266 = vmatprep.subr.bf16.mxu0 0
        %267 = vmatpush2.bf16.msra.mxu0 0
        %268 = vmatprep.subr.bf16.mxu0 0
        %269 = vmatpush2.bf16.msra.mxu0 0
        %270 = vmatprep.subr.bf16.mxu0 0
        %271 = vmatpush2.bf16.msra.mxu0 0
        %272 = vmatprep.subr.bf16.mxu0 0
        %273 = vmatpush2.bf16.msra.mxu0 0
        %274 = vmatprep.subr.bf16.mxu0 0
        %275 = vmatpush2.bf16.msra.mxu0 0
        %276 = vmatprep.mubr.bf16.mxu0 0
        %277 = vmatmul.mubr.bf16.gmra.mxu0 %v242
        %v278 = vpop.f32.mrf.mxu0
        %v279 = vadd.f32 0.0, %v278
        %v280 = vpop.f32.mrf.mxu0
        %v281 = vpop.f32.mrf.mxu0
        %v282 = vadd.f32 0.0, %v281
        %v283 = vpop.f32.mrf.mxu0
        %284 = vdwg.mxu0
        %v285 = vadd.f32 %v219, %v279
        %v286 = vadd.f32 %v220, %v282
        %287 = vst [vmem:[#allocation2] sm:$0xff] %v285
        %288 = vst [vmem:[#allocation2 + $0x8] sm:$0xff] %v286
        // Predicated region
        $region41: #{attention_forward.3} parent=27 // pred_check
          %p289 = pneg %p213
        $region42: #{attention_forward.3} parent=27 // pred_check_branch
          %291 = sbr.rel (%p289) target = $region44
        $region43: #{attention_forward.3} parent=27 // pred_region
          %v292 = vld [vmem:[#allocation2] sm:$0xff]
          %v293 = vld [vmem:[#allocation2 + $0x8] sm:$0xff]
          %v294 = vpack.c.bf16 %v293, %v292
          %v296 = vunpack.c.l.b16 %v294
          %v297 = vunpack.c.h.b16 %v294
          %v298 = vpack.c.b16 %v296, %v296
          %v299 = vpack.c.b16 %v297, %v297
          %302 = vst [vmem:[%s208] sm:$0xf] %v298
          %303 = vst [vmem:[%s208 + $0x4] sm:$0xf] %v299
        $region44: #{attention_forward.3} parent=27 // pred_fallthru
          _
        %s304 = sand.u32 %s102, 1
        %s305 = sand.u32 %s102, 1
        %s306 = smul.addr %s305, 8
        %s307 = scalar_lea.vmem [#allocation7], %s306
        // Predicated region
        $region45: #{attention_forward.3} parent=27 // pred_check
          %p308 = pneg %p112
        $region46: #{attention_forward.3} parent=27 // pred_check_branch
          %310 = sbr.rel (%p308) target = $region48
        $region47: #{attention_forward.3} parent=27 // pred_region
          %s311 = smul.u32 2, %s22
          %s312 = smul.addr %s311, 3
          %s313 = sadd.s32 %s23, %s312
          %s314 = smul.addr %s313, 4
          %s315 = scalar_lea.vmem %s2, %s314
          // Predicated region
          $region49: #{attention_forward.3} parent=47 // pred_check
            _
          $region50: #{attention_forward.3} parent=47 // pred_check_branch
            %317 = sbr.rel (0) target = $region52
          $region51: #{attention_forward.3} parent=47 // pred_region
            // Predicated region
            $region53: #{attention_forward.3} parent=51 // pred_check
              _
            $region54: #{attention_forward.3} parent=51 // pred_check_branch
              %319 = sbr.rel target = $region56
            $region55: #{attention_forward.3} parent=51 // pred_region
              // Predicated region
              $region68: #{attention_forward.3} parent=55 // pred_check
                _
              $region69: #{attention_forward.3} parent=55 // pred_check_branch
                %337 = sbr.rel (0) target = $region71
              $region70: #{attention_forward.3} parent=55 // pred_region
                loop: start=0, step=1, limit=1
                $region72: #{attention_forward.3} parent=70 // loop_pre_header
                  _
                $region73: #{attention_forward.3} parent=70 // loop_header
                  %s339 = sphi 0, %s343
                  %p340 = scmp.ge.s32.totalorder %s339, 1
                  %s344 = sphi %s307, %s307
                  %s345 = sphi %s315, %s315
                $region74: #{attention_forward.3} parent=70 // loop_header_branch
                  %342 = sbr.rel (%p340) target = $region78
                $region75: #{attention_forward.3} parent=70 // loop_body
                  _
                $region76: #{attention_forward.3} parent=70 // loop_footer
                  %s343 = sadd.s32 1, %s339
                $region77: #{attention_forward.3} parent=70 // loop_footer_branch
                  %338 = sbr.rel target = $region73
                $region78: #{attention_forward.3} parent=70 // loop_exit
                  _
                %s347 = ssub.s32 16, 1
                loop: start=0, step=1, limit=1
                $region79: #{attention_forward.3} parent=70 // loop_pre_header
                  _
                $region80: #{attention_forward.3} parent=70 // loop_header
                  %s349 = sphi 0, %s353
                  %p350 = scmp.ge.s32.totalorder %s349, 1
                  %s354 = sphi %s307, %s307
                  %s355 = sphi %s315, %s315
                $region81: #{attention_forward.3} parent=70 // loop_header_branch
                  %352 = sbr.rel (%p350) target = $region85
                $region82: #{attention_forward.3} parent=70 // loop_body
                  %v356 = vld [vmem:[%s354] sm:%s347]
                  %357 = vst [vmem:[%s355] sm:%s347] %v356
                  %v358 = vld [vmem:[%s354 + $0x4] sm:%s347]
                  %359 = vst [vmem:[%s355 + $0xc] sm:%s347] %v358
                $region83: #{attention_forward.3} parent=70 // loop_footer
                  %s353 = sadd.s32 1, %s349
                $region84: #{attention_forward.3} parent=70 // loop_footer_branch
                  %348 = sbr.rel target = $region80
                $region85: #{attention_forward.3} parent=70 // loop_exit
                  _
              $region71: #{attention_forward.3} parent=55 // pred_fallthru
                _
            $region56: #{attention_forward.3} parent=51 // pred_fallthru
              _
            // Predicated region
            $region57: #{attention_forward.3} parent=51 // pred_check
              _
            $region58: #{attention_forward.3} parent=51 // pred_check_branch
              %321 = sbr.rel (0) target = $region60
            $region59: #{attention_forward.3} parent=51 // pred_region
              %s323 = ssub.s32 16, 1
              loop: start=0, step=1, limit=1
              $region61: #{attention_forward.3} parent=59 // loop_pre_header
                _
              $region62: #{attention_forward.3} parent=59 // loop_header
                %s325 = sphi 0, %s329
                %p326 = scmp.ge.s32.totalorder %s325, 1
                %s330 = sphi %s307, %s307
                %s331 = sphi %s315, %s315
              $region63: #{attention_forward.3} parent=59 // loop_header_branch
                %328 = sbr.rel (%p326) target = $region67
              $region64: #{attention_forward.3} parent=59 // loop_body
                %v332 = vld [vmem:[%s330] sm:%s323]
                %333 = vst [vmem:[%s331] sm:%s323] %v332
                %v334 = vld [vmem:[%s330 + $0x4] sm:%s323]
                %335 = vst [vmem:[%s331 + $0xc] sm:%s323] %v334
              $region65: #{attention_forward.3} parent=59 // loop_footer
                %s329 = sadd.s32 1, %s325
              $region66: #{attention_forward.3} parent=59 // loop_footer_branch
                %324 = sbr.rel target = $region62
              $region67: #{attention_forward.3} parent=59 // loop_exit
                _
            $region60: #{attention_forward.3} parent=51 // pred_fallthru
              _
          $region52: #{attention_forward.3} parent=47 // pred_fallthru
            _
          %360 = vnop
        $region48: #{attention_forward.3} parent=27 // pred_fallthru
          _
      $region28: #{attention_forward.3} parent=5 // pred_fallthru
        _
      %p361 = scmp.le.s32.totalorder 2, %s12
      // Predicated region
      $region86: #{attention_forward.3} parent=5 // pred_check
        %p362 = pneg %p361
      $region87: #{attention_forward.3} parent=5 // pred_check_branch
        %364 = sbr.rel (%p362) target = $region89
      $region88: #{attention_forward.3} parent=5 // pred_region
        %s365 = ssub.s32 %s12, 2
        // Predicated region
        $region90: #{attention_forward.3} parent=88 // pred_check
          %p366 = pneg %p118
        $region91: #{attention_forward.3} parent=88 // pred_check_branch
          %368 = sbr.rel (%p366) target = $region93
        $region92: #{attention_forward.3} parent=88 // pred_region
          %s369 = sand.u32 %s103, 1
          %s370 = sand.u32 %s103, 1
          %s371 = smul.addr %s370, 8
          %s372 = scalar_lea.vmem [#allocation7], %s371
        $region93: #{attention_forward.3} parent=88 // pred_fallthru
          _
      $region89: #{attention_forward.3} parent=5 // pred_fallthru
        _
    $region6: #{attention_forward.3} parent=1 // loop_footer
      %s16 = sadd.s32 1, %s12
    $region7: #{attention_forward.3} parent=1 // loop_footer_branch
      %11 = sbr.rel target = $region3
    $region8: #{attention_forward.3} parent=1 // loop_exit
      _
    %373 = vsyncpa [#allocation4], 1
    %s374 = scalar_lea.sflag [#allocation4], 1
    %375 = vsyncpa %s374, 1
    %376 = vsyncpa [#allocation6], 1
    %s377 = scalar_lea.sflag [#allocation6], 1
    %378 = vsyncpa %s377, 1

// kernel: attention_forward.4
$region0: #{attention_forward.4}
  #allocation0 [shape = 'u32[]', space=smem, size = 0x4, offset = 0x4, fixed_abs, tag = 'smem constant byte address 0x4 - core index']
  #allocation1 [shape = 'u32[144,128]{1,0:T(1,128)}', space=vmem, size = 0x12000, scoped, tag = 'internal scratch']
  #allocation2 [shape = 'f32[4,8,1]{2,1,0:T(8,128)}', space=vmem, size = 0x4000, scoped, tag = 'scratch operand']
  #allocation3 [shape = 'f32[4,8,1]{2,1,0:T(8,128)}', space=vmem, size = 0x4000, scoped, tag = 'scratch operand']
  #allocation4 [shape = 'f32[4,8,32]{2,1,0:T(8,128)}', space=vmem, size = 0x4000, scoped, tag = 'scratch operand']
  %s0 = inlined_call_operand.vmem [shape: bf16[16,384], index: 0, kind: input, shape index: {}, may-alias: {0,1,2}]
  %s1 = inlined_call_operand.vmem [shape: bf16[16,384], index: 1, kind: input, shape index: {}, may-alias: {0,1,2}]
  %s2 = inlined_call_operand.vmem [shape: bf16[16,384], index: 2, kind: input, shape index: {}, may-alias: {0,1,2}]
  %s3 = inlined_call_operand.vmem [shape: bf16[16,128], index: 3, kind: output, shape index: {}]
  %s4 = sld [smem:[#allocation0]]
  $region53: #{attention_forward.4} parent=0
    _
  %s6 = ssub.s32 1, %s4
  %s7 = scalar_select 0, %s6, %s4
  loop: start=0, step=1, limit=4
  $region2: #{attention_forward.4} parent=0 // loop_pre_header
    _
  $region3: #{attention_forward.4} parent=0 // loop_header
    %s9 = sphi 0, %s13
    %p10 = scmp.ge.s32.totalorder %s9, 4
    %s16 = sphi 0, %s42
    %s17 = sphi 0, %s38
    %s18 = sphi 0, %s34
    %s19 = sphi 0, %s30
    %s20 = sphi 0, %s16
    %s21 = sphi 0, %s17
    %s22 = sphi 0, %s18
    %s23 = sphi 0, %s19
    %s24 = sphi 0, %s20
    %s25 = sphi 0, %s21
    %s26 = sphi 0, %s22
    %s27 = sphi 0, %s23
    %s49 = sphi 0, %s51
    %s52 = sphi 0, %s49
    %s53 = sphi 0, %s52
    %s69 = sphi 0, %s53
    %s81 = sphi 0, %s83
    %s84 = sphi 0, %s81
    %s85 = sphi 0, %s84
    %s101 = sphi 0, %s85
    %s113 = sphi 0, %s115
    %s116 = sphi 0, %s113
    %s117 = sphi 0, %s116
    %s133 = sphi 0, %s117
    %s143 = sphi 0, %s145
    %s146 = sphi 0, %s143
    %s147 = sphi 0, %s146
    %s163 = sphi 0, %s147
  $region4: #{attention_forward.4} parent=0 // loop_header_branch
    %12 = sbr.rel (%p10) target = $region8
  $region5: #{attention_forward.4} parent=0 // loop_body
    %s14 = ssub.s32 %s9, 1
    %s15 = ssub.s32 %s9, 2
    %s28 = sadd.s32 1, %s19
    %p29 = scmp.ge.s32.totalorder %s28, 1
    %s30 = scalar_select %p29, 0, %s28
    %s31 = sadd.s32 1, %s18
    %s32 = scalar_select %p29, %s31, %s18
    %p33 = scmp.ge.s32.totalorder %s32, 1
    %s34 = scalar_select %p33, 0, %s32
    %s35 = sadd.s32 1, %s17
    %s36 = scalar_select %p33, %s35, %s17
    %p37 = scmp.ge.s32.totalorder %s36, 1
    %s38 = scalar_select %p37, 0, %s36
    %s39 = sadd.s32 1, %s16
    %s40 = scalar_select %p37, %s39, %s16
    %p41 = scmp.ge.s32.totalorder %s40, 2
    %s42 = scalar_select %p41, 0, %s40
    %s43 = sadd.s32 %s16, %s18
    %s44 = sadd.s32 %s42, %s34
    %s45 = ssub.s32 %s43, %s44
    %s46 = ssub.s32 %s17, %s38
    %s47 = sor.u32 %s45, %s46
    %p48 = scmp.eq.s32.totalorder %s47, 0
    %s50 = sadd.s32 %s49, 1
    %s51 = scalar_select %p48, %s49, %s50
    %p54 = pneg %p48
    %p55 = scmp.eq.s32.totalorder %s9, 1
    %p56 = por %p54, %p55
    %p57 = scmp.ne.s32.totalorder %s49, %s52
    %p58 = scmp.eq.s32.totalorder %s9, 0
    %p59 = por %p57, %p58
    %p60 = scmp.ne.s32.totalorder %s49, %s52
    %p61 = scmp.eq.s32.totalorder %s14, 1
    %p62 = por %p60, %p61
    %p63 = scmp.ne.s32.totalorder %s52, %s53
    %p64 = scmp.eq.s32.totalorder %s14, 0
    %p65 = por %p63, %p64
    %p66 = scmp.ne.s32.totalorder %s52, %s53
    %p67 = scmp.eq.s32.totalorder %s15, 1
    %p68 = por %p66, %p67
    %p70 = scmp.ne.s32.totalorder %s53, %s69
    %p71 = scmp.eq.s32.totalorder %s15, 0
    %p72 = por %p70, %p71
    %s73 = sadd.s32 %s16, %s19
    %s74 = sadd.s32 %s17, 1
    %s75 = sadd.s32 %s42, %s30
    %s76 = sadd.s32 %s38, 1
    %s77 = ssub.s32 %s73, %s75
    %s78 = ssub.s32 %s74, %s76
    %s79 = sor.u32 %s77, %s78
    %p80 = scmp.eq.s32.totalorder %s79, 0
    %s82 = sadd.s32 %s81, 1
    %s83 = scalar_select %p80, %s81, %s82
    %p86 = pneg %p80
    %p87 = scmp.eq.s32.totalorder %s9, 1
    %p88 = por %p86, %p87
    %p89 = scmp.ne.s32.totalorder %s81, %s84
    %p90 = scmp.eq.s32.totalorder %s9, 0
    %p91 = por %p89, %p90
    %p92 = scmp.ne.s32.totalorder %s81, %s84
    %p93 = scmp.eq.s32.totalorder %s14, 1
    %p94 = por %p92, %p93
    %p95 = scmp.ne.s32.totalorder %s84, %s85
    %p96 = scmp.eq.s32.totalorder %s14, 0
    %p97 = por %p95, %p96
    %p98 = scmp.ne.s32.totalorder %s84, %s85
    %p99 = scmp.eq.s32.totalorder %s15, 1
    %p100 = por %p98, %p99
    %p102 = scmp.ne.s32.totalorder %s85, %s101
    %p103 = scmp.eq.s32.totalorder %s15, 0
    %p104 = por %p102, %p103
    %s105 = sadd.s32 %s16, %s19
    %s106 = sadd.s32 %s17, 2
    %s107 = sadd.s32 %s42, %s30
    %s108 = sadd.s32 %s38, 2
    %s109 = ssub.s32 %s105, %s107
    %s110 = ssub.s32 %s106, %s108
    %s111 = sor.u32 %s109, %s110
    %p112 = scmp.eq.s32.totalorder %s111, 0
    %s114 = sadd.s32 %s113, 1
    %s115 = scalar_select %p112, %s113, %s114
    %p118 = pneg %p112
    %p119 = scmp.eq.s32.totalorder %s9, 1
    %p120 = por %p118, %p119
    %p121 = scmp.ne.s32.totalorder %s113, %s116
    %p122 = scmp.eq.s32.totalorder %s9, 0
    %p123 = por %p121, %p122
    %p124 = scmp.ne.s32.totalorder %s113, %s116
    %p125 = scmp.eq.s32.totalorder %s14, 1
    %p126 = por %p124, %p125
    %p127 = scmp.ne.s32.totalorder %s116, %s117
    %p128 = scmp.eq.s32.totalorder %s14, 0
    %p129 = por %p127, %p128
    %p130 = scmp.ne.s32.totalorder %s116, %s117
    %p131 = scmp.eq.s32.totalorder %s15, 1
    %p132 = por %p130, %p131
    %p134 = scmp.ne.s32.totalorder %s117, %s133
    %p135 = scmp.eq.s32.totalorder %s15, 0
    %p136 = por %p134, %p135
    %s137 = sadd.s32 %s16, %s18
    %s138 = sadd.s32 %s42, %s34
    %s139 = ssub.s32 %s137, %s138
    %s140 = ssub.s32 %s17, %s38
    %s141 = sor.u32 %s139, %s140
    %p142 = scmp.eq.s32.totalorder %s141, 0
    %s144 = sadd.s32 %s143, 1
    %s145 = scalar_select %p142, %s143, %s144
    %p148 = pneg %p142
    %p149 = scmp.eq.s32.totalorder %s9, 1
    %p150 = por %p148, %p149
    %p151 = scmp.ne.s32.totalorder %s143, %s146
    %p152 = scmp.eq.s32.totalorder %s9, 0
    %p153 = por %p151, %p152
    %p154 = scmp.ne.s32.totalorder %s143, %s146
    %p155 = scmp.eq.s32.totalorder %s14, 1
    %p156 = por %p154, %p155
    %p157 = scmp.ne.s32.totalorder %s146, %s147
    %p158 = scmp.eq.s32.totalorder %s14, 0
    %p159 = por %p157, %p158
    %p160 = scmp.ne.s32.totalorder %s146, %s147
    %p161 = scmp.eq.s32.totalorder %s15, 1
    %p162 = por %p160, %p161
    %p164 = scmp.ne.s32.totalorder %s147, %s163
    %p165 = scmp.eq.s32.totalorder %s15, 0
    %p166 = por %p164, %p165
    %p167 = scmp.le.s32.totalorder 1, %s9
    %p168 = scmp.lt.s32.totalorder %s9, 3
    %p169 = pnand %p167, %p168
    %p170 = pneg %p169
    // Predicated region
    $region9: #{attention_forward.4} parent=5 // pred_check
      _
    $region10: #{attention_forward.4} parent=5 // pred_check_branch
      %172 = sbr.rel (%p169) target = $region12
    $region11: #{attention_forward.4} parent=5 // pred_region
      %s173 = ssub.s32 %s9, 1
    $region12: #{attention_forward.4} parent=5 // pred_fallthru
      _
    %p174 = scmp.lt.s32.totalorder %s9, 2
    // Predicated region
    $region13: #{attention_forward.4} parent=5 // pred_check
      %p175 = pneg %p174
    $region14: #{attention_forward.4} parent=5 // pred_check_branch
      %177 = sbr.rel (%p175) target = $region16
    $region15: #{attention_forward.4} parent=5 // pred_region
      // Predicated region
      $region17: #{attention_forward.4} parent=15 // pred_check
        %p178 = pneg %p59
      $region18: #{attention_forward.4} parent=15 // pred_check_branch
        %180 = sbr.rel (%p178) target = $region20
      $region19: #{attention_forward.4} parent=15 // pred_region
        %s181 = sadd.s32 %s16, %s18
        %p182 = scmp.lt.s32.totalorder %s181, 1
        %s183 = scalar_select %p182, %s181, 1
        %p184 = scmp.lt.s32.totalorder %s17, 2
        %s185 = scalar_select %p184, %s17, 2
        %s186 = smul.addr %s183, 3
        %s187 = sadd.s32 %s185, %s186
        %s188 = smul.addr %s187, 4
        %s189 = scalar_lea.vmem %s0, %s188
        %s190 = sadd.s32 %s16, %s18
      $region20: #{attention_forward.4} parent=15 // pred_fallthru
        _
      // Predicated region
      $region21: #{attention_forward.4} parent=15 // pred_check
        %p191 = pneg %p91
      $region22: #{attention_forward.4} parent=15 // pred_check_branch
        %193 = sbr.rel (%p191) target = $region24
      $region23: #{attention_forward.4} parent=15 // pred_region
        %s194 = sadd.s32 %s16, %s19
        %s195 = sadd.s32 %s17, 1
        %p196 = scmp.lt.s32.totalorder %s194, 1
        %s197 = scalar_select %p196, %s194, 1
        %p198 = scmp.lt.s32.totalorder %s195, 2
        %s199 = scalar_select %p198, %s195, 2
        %s200 = smul.addr %s197, 3
        %s201 = sadd.s32 %s199, %s200
        %s202 = smul.addr %s201, 4
        %s203 = scalar_lea.vmem %s1, %s202
        %s204 = sadd.s32 %s16, %s19
        %s205 = sadd.s32 %s17, 1
      $region24: #{attention_forward.4} parent=15 // pred_fallthru
        _
      // Predicated region
      $region25: #{attention_forward.4} parent=15 // pred_check
        %p206 = pneg %p123
      $region26: #{attention_forward.4} parent=15 // pred_check_branch
        %208 = sbr.rel (%p206) target = $region28
      $region27: #{attention_forward.4} parent=15 // pred_region
        %s209 = sadd.s32 %s16, %s19
        %s210 = sadd.s32 %s17, 2
        %p211 = scmp.lt.s32.totalorder %s209, 1
        %s212 = scalar_select %p211, %s209, 1
        %p213 = scmp.lt.s32.totalorder %s210, 2
        %s214 = scalar_select %p213, %s210, 2
        %s215 = smul.addr %s212, 3
        %s216 = sadd.s32 %s214, %s215
        %s217 = smul.addr %s216, 4
        %s218 = scalar_lea.vmem %s2, %s217
        %s219 = sadd.s32 %s16, %s19
        %s220 = sadd.s32 %s17, 2
      $region28: #{attention_forward.4} parent=15 // pred_fallthru
        _
    $region16: #{attention_forward.4} parent=5 // pred_fallthru
      _
    %p221 = scmp.le.s32.totalorder 1, %s9
    %p222 = scmp.lt.s32.totalorder %s9, 3
    %p223 = pnand %p221, %p222
    %p224 = pneg %p223
    // Predicated region
    $region29: #{attention_forward.4} parent=5 // pred_check
      _
    $region30: #{attention_forward.4} parent=5 // pred_check_branch
      %226 = sbr.rel (%p223) target = $region32
    $region31: #{attention_forward.4} parent=5 // pred_region
      %s227 = ssub.s32 %s9, 1
      %s228 = sadd.s32 %s20, %s22
      %p229 = scmp.lt.s32.totalorder %s228, 1
      %s230 = scalar_select %p229, %s228, 1
      %p231 = scmp.lt.s32.totalorder %s21, 2
      %s232 = scalar_select %p231, %s21, 2
      %s233 = smul.addr %s230, 3
      %s234 = sadd.s32 %s232, %s233
      %s235 = smul.addr %s234, 4
      %s236 = scalar_lea.vmem %s0, %s235
      %p237 = pneg %p65
      %p238 = pneg %p62
      %s239 = sadd.s32 %s20, %s23
      %s240 = sadd.s32 %s21, 1
      %p241 = scmp.lt.s32.totalorder %s239, 1
      %s242 = scalar_select %p241, %s239, 1
      %p243 = scmp.lt.s32.totalorder %s240, 2
      %s244 = scalar_select %p243, %s240, 2
      %s245 = smul.addr %s242, 3
      %s246 = sadd.s32 %s244, %s245
      %s247 = smul.addr %s246, 4
      %s248 = scalar_lea.vmem %s1, %s247
      %p249 = pneg %p97
      %p250 = pneg %p94
      %s251 = sadd.s32 %s20, %s23
      %s252 = sadd.s32 %s21, 2
      %p253 = scmp.lt.s32.totalorder %s251, 1
      %s254 = scalar_select %p253, %s251, 1
      %p255 = scmp.lt.s32.totalorder %s252, 2
      %s256 = scalar_select %p255, %s252, 2
      %s257 = smul.addr %s254, 3
      %s258 = sadd.s32 %s256, %s257
      %s259 = smul.addr %s258, 4
      %s260 = scalar_lea.vmem %s2, %s259
      %p261 = pneg %p129
      %p262 = pneg %p126
      %p263 = pneg %p159
      %p264 = pneg %p156
      %s265 = sadd.s32 %s20, %s22
      %p266 = scmp.lt.s32.totalorder %s265, 1
      %s267 = scalar_select %p266, %s265, 1
      %p268 = scmp.lt.s32.totalorder %s21, 0
      %s269 = scalar_select %p268, %s21, 0
      %s270 = sadd.s32 %s269, %s267
      %s271 = smul.addr %s270, 4
      %s272 = scalar_lea.vmem %s3, %s271
      %s273 = sadd.s32 %s20, %s22
      %p274 = scmp.lt.s32.totalorder %s273, 1
      %s275 = scalar_select %p274, %s273, 1
      %p276 = scmp.lt.s32.totalorder %s21, 2
      %s277 = scalar_select %p276, %s21, 2
      %s278 = smul.addr %s275, 3
      %s279 = sadd.s32 %s277, %s278
      %s280 = smul.addr %s279, 4
      %s281 = scalar_lea.vmem %s0, %s280
      %s282 = sadd.s32 %s20, %s22
      %s283 = sadd.s32 %s20, %s23
      %s284 = sadd.s32 %s21, 1
      %p285 = scmp.lt.s32.totalorder %s283, 1
      %s286 = scalar_select %p285, %s283, 1
      %p287 = scmp.lt.s32.totalorder %s284, 2
      %s288 = scalar_select %p287, %s284, 2
      %s289 = smul.addr %s286, 3
      %s290 = sadd.s32 %s288, %s289
      %s291 = smul.addr %s290, 4
      %s292 = scalar_lea.vmem %s1, %s291
      %s293 = sadd.s32 %s20, %s23
      %s294 = sadd.s32 %s21, 1
      %s295 = sadd.s32 %s20, %s23
      %s296 = sadd.s32 %s21, 2
      %p297 = scmp.lt.s32.totalorder %s295, 1
      %s298 = scalar_select %p297, %s295, 1
      %p299 = scmp.lt.s32.totalorder %s296, 2
      %s300 = scalar_select %p299, %s296, 2
      %s301 = smul.addr %s298, 3
      %s302 = sadd.s32 %s300, %s301
      %s303 = smul.addr %s302, 4
      %s304 = scalar_lea.vmem %s2, %s303
      %s305 = sadd.s32 %s20, %s23
      %s306 = sadd.s32 %s21, 2
      %s307 = sadd.s32 %s20, %s22
      %p308 = scmp.lt.s32.totalorder %s307, 1
      %s309 = scalar_select %p308, %s307, 1
      %p310 = scmp.lt.s32.totalorder %s21, 0
      %s311 = scalar_select %p310, %s21, 0
      %s312 = sadd.s32 %s311, %s309
      %s313 = smul.addr %s312, 4
      %s314 = scalar_lea.vmem %s3, %s313
      %s315 = sadd.s32 %s20, %s22
      %p318 = scmp.eq.s32.totalorder %s23, 0
      // Predicated region
      $region33: #{attention_forward.4} parent=31 // pred_check
        %p319 = pneg %p318
      $region34: #{attention_forward.4} parent=31 // pred_check_branch
        %321 = sbr.rel (%p319) target = $region36
      $region35: #{attention_forward.4} parent=31 // pred_region
        %vm322 = vcmask 7168
        %323 = vst.msk [vmem:[#allocation2] sm:$0xff] %vm322, -inf
        %324 = vst.msk [vmem:[#allocation2 + $0x8] sm:$0xff] %vm322, -inf
        %325 = vst.msk [vmem:[#allocation2 + $0x10] sm:$0xff] %vm322, -inf
        %326 = vst.msk [vmem:[#allocation2 + $0x18] sm:$0xff] %vm322, -inf
        %327 = vst.msk [vmem:[#allocation3] sm:$0xff] %vm322, 0.0
        %328 = vst.msk [vmem:[#allocation3 + $0x8] sm:$0xff] %vm322, 0.0
        %329 = vst.msk [vmem:[#allocation3 + $0x10] sm:$0xff] %vm322, 0.0
        %330 = vst.msk [vmem:[#allocation3 + $0x18] sm:$0xff] %vm322, 0.0
        %vm331 = vcmask 261120
        %332 = vst.msk [vmem:[#allocation4] sm:$0xff] %vm331, 0.0
        %333 = vst.msk [vmem:[#allocation4 + $0x8] sm:$0xff] %vm331, 0.0
        %334 = vst.msk [vmem:[#allocation4 + $0x10] sm:$0xff] %vm331, 0.0
        %335 = vst.msk [vmem:[#allocation4 + $0x18] sm:$0xff] %vm331, 0.0
      $region36: #{attention_forward.4} parent=31 // pred_fallthru
        _
      %v336 = vld [vmem:[%s281] sm:$0xf]
      %v337 = vmul.bf16 %v336, 1052065461
      %v338 = vld [vmem:[%s292] sm:$0xf]
      %v339 = vld [vmem:[%s304] sm:$0xf]
      %vm340 = vcmask 261120
      %v342 = vsel %vm340, %v337, 0
      %v345 = vsel %vm340, %v338, 0
      %347 = vmatprep.subr.bf16.mxu0 0
      %348 = vmatpush1.bf16.xpose.msra.mxu0 0
      %349 = vmatprep.subr.bf16.mxu0 0
      %350 = vmatpush1.bf16.xpose.msra.mxu0 0
      %351 = vmatprep.subr.bf16.mxu0 0
      %352 = vmatpush1.bf16.xpose.msra.mxu0 0
      %353 = vmatprep.subr.bf16.mxu0 0
      %354 = vmatpush1.bf16.xpose.msra.mxu0 0
      %355 = vmatprep.subr.bf16.mxu0 0
      %356 = vmatpush1.bf16.xpose.msra.mxu0 0
      %357 = vmatprep.subr.bf16.mxu0 0
      %358 = vmatpush1.bf16.xpose.msra.mxu0 0
      %359 = vmatprep.subr.bf16.mxu0 0
      %360 = vmatpush1.bf16.xpose.msra.mxu0 0
      %361 = vmatprep.subr.bf16.mxu0 0
      %362 = vmatpush1.bf16.xpose.msra.mxu0 %v345
      %363 = vmatprep.subr.bf16.mxu0 0
      %364 = vmatpush2.bf16.xpose.msra.mxu0 0
      %365 = vmatprep.subr.bf16.mxu0 0
      %366 = vmatpush2.bf16.xpose.msra.mxu0 0
      %367 = vmatprep.subr.bf16.mxu0 0
      %368 = vmatpush2.bf16.xpose.msra.mxu0 0
      %369 = vmatprep.subr.bf16.mxu0 0
      %370 = vmatpush2.bf16.xpose.msra.mxu0 0
      %371 = vmatprep.subr.bf16.mxu0 0
      %372 = vmatpush2.bf16.xpose.msra.mxu0 0
      %373 = vmatprep.subr.bf16.mxu0 0
      %374 = vmatpush2.bf16.xpose.msra.mxu0 0
      %375 = vmatprep.subr.bf16.mxu0 0
      %376 = vmatpush2.bf16.xpose.msra.mxu0 0
      %377 = vmatprep.subr.bf16.mxu0 0
      %378 = vmatpush2.bf16.xpose.msra.mxu0 0
      %379 = vmatprep.mubr.bf16.mxu0 0
      %380 = vmatmul.mubr.bf16.gmra.mxu0 %v342
      %v381 = vpop.f32.mrf.mxu0
      %v382 = vadd.f32 0.0, %v381
      %v383 = vpop.f32.mrf.mxu0
      %v384 = vpop.f32.mrf.mxu0
      %v385 = vpop.f32.mrf.mxu0
      %386 = vdwg.mxu0
      %v387 = vld [vmem:[#allocation2] sm:$0xff]
      %vm388 = vcmask 64512
      %v389 = vsel %vm388, %v382, -inf
      %390 = vmax.xlane.f32.xlu0 %v389
      %v391 = vpop.xlane.xlu0 %390
      %v392 = vmax.f32 %v387, %v391
      %v393 = vsub.f32 %v387, %v392
      %v394 = vmul.f32 %v393, 1.442695
      %v395 = vpow.pop %v394
      %397 = vset.pattern.permute.xlu0 0
      %398 = vperm.xlu0 %397, %v392
      %v399 = vpop.permute.xlu0 %398
      %v401 = vsub.f32 %v382, %v399
      %v402 = vmul.f32 %v401, 1.442695
      %v403 = vpow.pop %v402
      %v404 = vld [vmem:[#allocation3] sm:$0xff]
      %v405 = vmul.f32 %v395, %v404
      %v406 = vsel %vm388, %v403, 0.0
      %407 = vadd.xlane.f32.xlu0 %v406
      %v408 = vpop.xlane.xlu0 %407
      %v409 = vadd.f32 %v405, %v408
      %vm410 = vcmask 7168
      %411 = vst.msk [vmem:[#allocation3] sm:$0xff] %vm410, %v409
      %v412 = vld [vmem:[#allocation4] sm:$0xff]
      %414 = vset.pattern.permute.xlu0 0
      %415 = vperm.xlu0 %414, %v395
      %v416 = vpop.permute.xlu0 %415
      %v418 = vmul.f32 %v416, %v412
      %v419 = vpack.c.bf16 %v403, %v403
      %v421 = vsel %vm388, %v419, 0
      %vm423 = vcmask 1043456
      %v425 = vsel %vm423, %v339, 0
      %427 = vmatprep.subr.bf16.mxu0 0
      %428 = vmatpush1.bf16.msra.mxu0 0
      %429 = vmatprep.subr.bf16.mxu0 0
      %430 = vmatpush1.bf16.msra.mxu0 0
      %431 = vmatprep.subr.bf16.mxu0 0
      %432 = vmatpush1.bf16.msra.mxu0 0
      %433 = vmatprep.subr.bf16.mxu0 0
      %434 = vmatpush1.bf16.msra.mxu0 0
      %435 = vmatprep.subr.bf16.mxu0 0
      %436 = vmatpush1.bf16.msra.mxu0 0
      %437 = vmatprep.subr.bf16.mxu0 0
      %438 = vmatpush1.bf16.msra.mxu0 0
      %439 = vmatprep.subr.bf16.mxu0 0
      %440 = vmatpush1.bf16.msra.mxu0 0
      %441 = vmatprep.subr.bf16.mxu0 0
      %442 = vmatpush1.bf16.msra.mxu0 %v425
      %443 = vmatprep.subr.bf16.mxu0 0
      %444 = vmatpush2.bf16.msra.mxu0 0
      %445 = vmatprep.subr.bf16.mxu0 0
      %446 = vmatpush2.bf16.msra.mxu0 0
      %447 = vmatprep.subr.bf16.mxu0 0
      %448 = vmatpush2.bf16.msra.mxu0 0
      %449 = vmatprep.subr.bf16.mxu0 0
      %450 = vmatpush2.bf16.msra.mxu0 0
      %451 = vmatprep.subr.bf16.mxu0 0
      %452 = vmatpush2.bf16.msra.mxu0 0
      %453 = vmatprep.subr.bf16.mxu0 0
      %454 = vmatpush2.bf16.msra.mxu0 0
      %455 = vmatprep.subr.bf16.mxu0 0
      %456 = vmatpush2.bf16.msra.mxu0 0
      %457 = vmatprep.subr.bf16.mxu0 0
      %458 = vmatpush2.bf16.msra.mxu0 0
      %459 = vmatprep.mubr.bf16.mxu0 0
      %460 = vmatmul.mubr.bf16.gmra.mxu0 %v421
      %v461 = vpop.f32.mrf.mxu0
      %v462 = vadd.f32 0.0, %v461
      %v463 = vpop.f32.mrf.mxu0
      %v464 = vpop.f32.mrf.mxu0
      %v465 = vpop.f32.mrf.mxu0
      %466 = vdwg.mxu0
      %v467 = vadd.f32 %v418, %v462
      %468 = vst.msk [vmem:[#allocation4] sm:$0xff] %vm340, %v467
      %469 = vst.msk [vmem:[#allocation2] sm:$0xff] %vm410, %v392
      %v471 = vunpack.c.l.b16 %v337
      %v472 = vpack.c.b16 %v471, %v471
      %473 = vrot.lane.b32.xlu0 %v472, 96
      %v474 = vpop.permute.xlu0 %473
      %v476 = vunpack.c.l.b16 %v338
      %v477 = vpack.c.b16 %v476, %v476
      %478 = vrot.lane.b32.xlu0 %v477, 96
      %v479 = vpop.permute.xlu0 %478
      %v481 = vsel %vm340, %v474, 0
      %v484 = vsel %vm340, %v479, 0
      %486 = vmatprep.subr.bf16.mxu0 0
      %487 = vmatpush1.bf16.xpose.msra.mxu0 0
      %488 = vmatprep.subr.bf16.mxu0 0
      %489 = vmatpush1.bf16.xpose.msra.mxu0 0
      %490 = vmatprep.subr.bf16.mxu0 0
      %491 = vmatpush1.bf16.xpose.msra.mxu0 0
      %492 = vmatprep.subr.bf16.mxu0 0
      %493 = vmatpush1.bf16.xpose.msra.mxu0 0
      %494 = vmatprep.subr.bf16.mxu0 0
      %495 = vmatpush1.bf16.xpose.msra.mxu0 0
      %496 = vmatprep.subr.bf16.mxu0 0
      %497 = vmatpush1.bf16.xpose.msra.mxu0 0
      %498 = vmatprep.subr.bf16.mxu0 0
      %499 = vmatpush1.bf16.xpose.msra.mxu0 0
      %500 = vmatprep.subr.bf16.mxu0 0
      %501 = vmatpush1.bf16.xpose.msra.mxu0 %v484
      %502 = vmatprep.subr.bf16.mxu0 0
      %503 = vmatpush2.bf16.xpose.msra.mxu0 0
      %504 = vmatprep.subr.bf16.mxu0 0
      %505 = vmatpush2.bf16.xpose.msra.mxu0 0
      %506 = vmatprep.subr.bf16.mxu0 0
      %507 = vmatpush2.bf16.xpose.msra.mxu0 0
      %508 = vmatprep.subr.bf16.mxu0 0
      %509 = vmatpush2.bf16.xpose.msra.mxu0 0
      %510 = vmatprep.subr.bf16.mxu0 0
      %511 = vmatpush2.bf16.xpose.msra.mxu0 0
      %512 = vmatprep.subr.bf16.mxu0 0
      %513 = vmatpush2.bf16.xpose.msra.mxu0 0
      %514 = vmatprep.subr.bf16.mxu0 0
      %515 = vmatpush2.bf16.xpose.msra.mxu0 0
      %516 = vmatprep.subr.bf16.mxu0 0
      %517 = vmatpush2.bf16.xpose.msra.mxu0 0
      %518 = vmatprep.mubr.bf16.mxu0 0
      %519 = vmatmul.mubr.bf16.gmra.mxu0 %v481
      %v520 = vpop.f32.mrf.mxu0
      %v521 = vadd.f32 0.0, %v520
      %v522 = vpop.f32.mrf.mxu0
      %v523 = vpop.f32.mrf.mxu0
      %v524 = vpop.f32.mrf.mxu0
      %525 = vdwg.mxu0
      %s526 = scalar_lea.vmem [#allocation2], 8
      %v527 = vld [vmem:[%s526] sm:$0xff]
      %v528 = vsel %vm388, %v521, -inf
      %529 = vmax.xlane.f32.xlu0 %v528
      %v530 = vpop.xlane.xlu0 %529
      %v531 = vmax.f32 %v527, %v530
      %v532 = vsub.f32 %v527, %v531
      %v533 = vmul.f32 %v532, 1.442695
      %v534 = vpow.pop %v533
      %536 = vset.pattern.permute.xlu0 0
      %537 = vperm.xlu0 %536, %v531
      %v538 = vpop.permute.xlu0 %537
      %v540 = vsub.f32 %v521, %v538
      %v541 = vmul.f32 %v540, 1.442695
      %v542 = vpow.pop %v541
      %s543 = scalar_lea.vmem [#allocation3], 8
      %v544 = vld [vmem:[%s543] sm:$0xff]
      %v545 = vmul.f32 %v534, %v544
      %v546 = vsel %vm388, %v542, 0.0
      %547 = vadd.xlane.f32.xlu0 %v546
      %v548 = vpop.xlane.xlu0 %547
      %v549 = vadd.f32 %v545, %v548
      %550 = vst.msk [vmem:[%s543] sm:$0xff] %vm410, %v549
      %s551 = scalar_lea.vmem [#allocation4], 8
      %v552 = vld [vmem:[%s551] sm:$0xff]
      %554 = vset.pattern.permute.xlu0 0
      %555 = vperm.xlu0 %554, %v534
      %v556 = vpop.permute.xlu0 %555
      %v558 = vmul.f32 %v556, %v552
      %v559 = vpack.c.bf16 %v542, %v542
      %v561 = vunpack.c.l.b16 %v339
      %v562 = vpack.c.b16 %v561, %v561
      %563 = vrot.lane.b32.xlu0 %v562, 96
      %v564 = vpop.permute.xlu0 %563
      %v566 = vsel %vm388, %v559, 0
      %v569 = vsel %vm423, %v564, 0
      %571 = vmatprep.subr.bf16.mxu0 0
      %572 = vmatpush1.bf16.msra.mxu0 0
      %573 = vmatprep.subr.bf16.mxu0 0
      %574 = vmatpush1.bf16.msra.mxu0 0
      %575 = vmatprep.subr.bf16.mxu0 0
      %576 = vmatpush1.bf16.msra.mxu0 0
      %577 = vmatprep.subr.bf16.mxu0 0
      %578 = vmatpush1.bf16.msra.mxu0 0
      %579 = vmatprep.subr.bf16.mxu0 0
      %580 = vmatpush1.bf16.msra.mxu0 0
      %581 = vmatprep.subr.bf16.mxu0 0
      %582 = vmatpush1.bf16.msra.mxu0 0
      %583 = vmatprep.subr.bf16.mxu0 0
      %584 = vmatpush1.bf16.msra.mxu0 0
      %585 = vmatprep.subr.bf16.mxu0 0
      %586 = vmatpush1.bf16.msra.mxu0 %v569
      %587 = vmatprep.subr.bf16.mxu0 0
      %588 = vmatpush2.bf16.msra.mxu0 0
      %589 = vmatprep.subr.bf16.mxu0 0
      %590 = vmatpush2.bf16.msra.mxu0 0
      %591 = vmatprep.subr.bf16.mxu0 0
      %592 = vmatpush2.bf16.msra.mxu0 0
      %593 = vmatprep.subr.bf16.mxu0 0
      %594 = vmatpush2.bf16.msra.mxu0 0
      %595 = vmatprep.subr.bf16.mxu0 0
      %596 = vmatpush2.bf16.msra.mxu0 0
      %597 = vmatprep.subr.bf16.mxu0 0
      %598 = vmatpush2.bf16.msra.mxu0 0
      %599 = vmatprep.subr.bf16.mxu0 0
      %600 = vmatpush2.bf16.msra.mxu0 0
      %601 = vmatprep.subr.bf16.mxu0 0
      %602 = vmatpush2.bf16.msra.mxu0 0
      %603 = vmatprep.mubr.bf16.mxu0 0
      %604 = vmatmul.mubr.bf16.gmra.mxu0 %v566
      %v605 = vpop.f32.mrf.mxu0
      %v606 = vadd.f32 0.0, %v605
      %v607 = vpop.f32.mrf.mxu0
      %v608 = vpop.f32.mrf.mxu0
      %v609 = vpop.f32.mrf.mxu0
      %610 = vdwg.mxu0
      %v611 = vadd.f32 %v558, %v606
      %612 = vst.msk [vmem:[%s551] sm:$0xff] %vm340, %v611
      %613 = vst.msk [vmem:[%s526] sm:$0xff] %vm410, %v531
      %614 = vrot.lane.b32.xlu0 %v472, 64
      %v615 = vpop.permute.xlu0 %614
      %616 = vrot.lane.b32.xlu0 %v477, 64
      %v617 = vpop.permute.xlu0 %616
      %v619 = vsel %vm340, %v615, 0
      %v622 = vsel %vm340, %v617, 0
      %624 = vmatprep.subr.bf16.mxu0 0
      %625 = vmatpush1.bf16.xpose.msra.mxu0 0
      %626 = vmatprep.subr.bf16.mxu0 0
      %627 = vmatpush1.bf16.xpose.msra.mxu0 0
      %628 = vmatprep.subr.bf16.mxu0 0
      %629 = vmatpush1.bf16.xpose.msra.mxu0 0
      %630 = vmatprep.subr.bf16.mxu0 0
      %631 = vmatpush1.bf16.xpose.msra.mxu0 0
      %632 = vmatprep.subr.bf16.mxu0 0
      %633 = vmatpush1.bf16.xpose.msra.mxu0 0
      %634 = vmatprep.subr.bf16.mxu0 0
      %635 = vmatpush1.bf16.xpose.msra.mxu0 0
      %636 = vmatprep.subr.bf16.mxu0 0
      %637 = vmatpush1.bf16.xpose.msra.mxu0 0
      %638 = vmatprep.subr.bf16.mxu0 0
      %639 = vmatpush1.bf16.xpose.msra.mxu0 %v622
      %640 = vmatprep.subr.bf16.mxu0 0
      %641 = vmatpush2.bf16.xpose.msra.mxu0 0
      %642 = vmatprep.subr.bf16.mxu0 0
      %643 = vmatpush2.bf16.xpose.msra.mxu0 0
      %644 = vmatprep.subr.bf16.mxu0 0
      %645 = vmatpush2.bf16.xpose.msra.mxu0 0
      %646 = vmatprep.subr.bf16.mxu0 0
      %647 = vmatpush2.bf16.xpose.msra.mxu0 0
      %648 = vmatprep.subr.bf16.mxu0 0
      %649 = vmatpush2.bf16.xpose.msra.mxu0 0
      %650 = vmatprep.subr.bf16.mxu0 0
      %651 = vmatpush2.bf16.xpose.msra.mxu0 0
      %652 = vmatprep.subr.bf16.mxu0 0
      %653 = vmatpush2.bf16.xpose.msra.mxu0 0
      %654 = vmatprep.subr.bf16.mxu0 0
      %655 = vmatpush2.bf16.xpose.msra.mxu0 0
      %656 = vmatprep.mubr.bf16.mxu0 0
      %657 = vmatmul.mubr.bf16.gmra.mxu0 %v619
      %v658 = vpop.f32.mrf.mxu0
      %v659 = vadd.f32 0.0, %v658
      %v660 = vpop.f32.mrf.mxu0
      %v661 = vpop.f32.mrf.mxu0
      %v662 = vpop.f32.mrf.mxu0
      %663 = vdwg.mxu0
      %s664 = scalar_lea.vmem [#allocation2], 16
      %v665 = vld [vmem:[%s664] sm:$0xff]
      %v666 = vsel %vm388, %v659, -inf
      %667 = vmax.xlane.f32.xlu0 %v666
      %v668 = vpop.xlane.xlu0 %667
      %v669 = vmax.f32 %v665, %v668
      %v670 = vsub.f32 %v665, %v669
      %v671 = vmul.f32 %v670, 1.442695
      %v672 = vpow.pop %v671
      %674 = vset.pattern.permute.xlu0 0
      %675 = vperm.xlu0 %674, %v669
      %v676 = vpop.permute.xlu0 %675
      %v678 = vsub.f32 %v659, %v676
      %v679 = vmul.f32 %v678, 1.442695
      %v680 = vpow.pop %v679
      %s681 = scalar_lea.vmem [#allocation3], 16
      %v682 = vld [vmem:[%s681] sm:$0xff]
      %v683 = vmul.f32 %v672, %v682
      %v684 = vsel %vm388, %v680, 0.0
      %685 = vadd.xlane.f32.xlu0 %v684
      %v686 = vpop.xlane.xlu0 %685
      %v687 = vadd.f32 %v683, %v686
      %688 = vst.msk [vmem:[%s681] sm:$0xff] %vm410, %v687
      %s689 = scalar_lea.vmem [#allocation4], 16
      %v690 = vld [vmem:[%s689] sm:$0xff]
      %692 = vset.pattern.permute.xlu0 0
      %693 = vperm.xlu0 %692, %v672
      %v694 = vpop.permute.xlu0 %693
      %v696 = vmul.f32 %v694, %v690
      %v697 = vpack.c.bf16 %v680, %v680
      %698 = vrot.lane.b32.xlu0 %v562, 64
      %v699 = vpop.permute.xlu0 %698
      %v701 = vsel %vm388, %v697, 0
      %v704 = vsel %vm423, %v699, 0
      %706 = vmatprep.subr.bf16.mxu0 0
      %707 = vmatpush1.bf16.msra.mxu0 0
      %708 = vmatprep.subr.bf16.mxu0 0
      %709 = vmatpush1.bf16.msra.mxu0 0
      %710 = vmatprep.subr.bf16.mxu0 0
      %711 = vmatpush1.bf16.msra.mxu0 0
      %712 = vmatprep.subr.bf16.mxu0 0
      %713 = vmatpush1.bf16.msra.mxu0 0
      %714 = vmatprep.subr.bf16.mxu0 0
      %715 = vmatpush1.bf16.msra.mxu0 0
      %716 = vmatprep.subr.bf16.mxu0 0
      %717 = vmatpush1.bf16.msra.mxu0 0
      %718 = vmatprep.subr.bf16.mxu0 0
      %719 = vmatpush1.bf16.msra.mxu0 0
      %720 = vmatprep.subr.bf16.mxu0 0
      %721 = vmatpush1.bf16.msra.mxu0 %v704
      %722 = vmatprep.subr.bf16.mxu0 0
      %723 = vmatpush2.bf16.msra.mxu0 0
      %724 = vmatprep.subr.bf16.mxu0 0
      %725 = vmatpush2.bf16.msra.mxu0 0
      %726 = vmatprep.subr.bf16.mxu0 0
      %727 = vmatpush2.bf16.msra.mxu0 0
      %728 = vmatprep.subr.bf16.mxu0 0
      %729 = vmatpush2.bf16.msra.mxu0 0
      %730 = vmatprep.subr.bf16.mxu0 0
      %731 = vmatpush2.bf16.msra.mxu0 0
      %732 = vmatprep.subr.bf16.mxu0 0
      %733 = vmatpush2.bf16.msra.mxu0 0
      %734 = vmatprep.subr.bf16.mxu0 0
      %735 = vmatpush2.bf16.msra.mxu0 0
      %736 = vmatprep.subr.bf16.mxu0 0
      %737 = vmatpush2.bf16.msra.mxu0 0
      %738 = vmatprep.mubr.bf16.mxu0 0
      %739 = vmatmul.mubr.bf16.gmra.mxu0 %v701
      %v740 = vpop.f32.mrf.mxu0
      %v741 = vadd.f32 0.0, %v740
      %v742 = vpop.f32.mrf.mxu0
      %v743 = vpop.f32.mrf.mxu0
      %v744 = vpop.f32.mrf.mxu0
      %745 = vdwg.mxu0
      %v746 = vadd.f32 %v696, %v741
      %747 = vst.msk [vmem:[%s689] sm:$0xff] %vm340, %v746
      %748 = vst.msk [vmem:[%s664] sm:$0xff] %vm410, %v669
      %749 = vrot.lane.b32.xlu0 %v472, 32
      %v750 = vpop.permute.xlu0 %749
      %751 = vrot.lane.b32.xlu0 %v477, 32
      %v752 = vpop.permute.xlu0 %751
      %v754 = vsel %vm340, %v750, 0
      %v757 = vsel %vm340, %v752, 0
      %759 = vmatprep.subr.bf16.mxu0 0
      %760 = vmatpush1.bf16.xpose.msra.mxu0 0
      %761 = vmatprep.subr.bf16.mxu0 0
      %762 = vmatpush1.bf16.xpose.msra.mxu0 0
      %763 = vmatprep.subr.bf16.mxu0 0
      %764 = vmatpush1.bf16.xpose.msra.mxu0 0
      %765 = vmatprep.subr.bf16.mxu0 0
      %766 = vmatpush1.bf16.xpose.msra.mxu0 0
      %767 = vmatprep.subr.bf16.mxu0 0
      %768 = vmatpush1.bf16.xpose.msra.mxu0 0
      %769 = vmatprep.subr.bf16.mxu0 0
      %770 = vmatpush1.bf16.xpose.msra.mxu0 0
      %771 = vmatprep.subr.bf16.mxu0 0
      %772 = vmatpush1.bf16.xpose.msra.mxu0 0
      %773 = vmatprep.subr.bf16.mxu0 0
      %774 = vmatpush1.bf16.xpose.msra.mxu0 %v757
      %775 = vmatprep.subr.bf16.mxu0 0
      %776 = vmatpush2.bf16.xpose.msra.mxu0 0
      %777 = vmatprep.subr.bf16.mxu0 0
      %778 = vmatpush2.bf16.xpose.msra.mxu0 0
      %779 = vmatprep.subr.bf16.mxu0 0
      %780 = vmatpush2.bf16.xpose.msra.mxu0 0
      %781 = vmatprep.subr.bf16.mxu0 0
      %782 = vmatpush2.bf16.xpose.msra.mxu0 0
      %783 = vmatprep.subr.bf16.mxu0 0
      %784 = vmatpush2.bf16.xpose.msra.mxu0 0
      %785 = vmatprep.subr.bf16.mxu0 0
      %786 = vmatpush2.bf16.xpose.msra.mxu0 0
      %787 = vmatprep.subr.bf16.mxu0 0
      %788 = vmatpush2.bf16.xpose.msra.mxu0 0
      %789 = vmatprep.subr.bf16.mxu0 0
      %790 = vmatpush2.bf16.xpose.msra.mxu0 0
      %791 = vmatprep.mubr.bf16.mxu0 0
      %792 = vmatmul.mubr.bf16.gmra.mxu0 %v754
      %v793 = vpop.f32.mrf.mxu0
      %v794 = vadd.f32 0.0, %v793
      %v795 = vpop.f32.mrf.mxu0
      %v796 = vpop.f32.mrf.mxu0
      %v797 = vpop.f32.mrf.mxu0
      %798 = vdwg.mxu0
      %s799 = scalar_lea.vmem [#allocation2], 24
      %v800 = vld [vmem:[%s799] sm:$0xff]
      %v801 = vsel %vm388, %v794, -inf
      %802 = vmax.xlane.f32.xlu0 %v801
      %v803 = vpop.xlane.xlu0 %802
      %v804 = vmax.f32 %v800, %v803
      %v805 = vsub.f32 %v800, %v804
      %v806 = vmul.f32 %v805, 1.442695
      %v807 = vpow.pop %v806
      %809 = vset.pattern.permute.xlu0 0
      %810 = vperm.xlu0 %809, %v804
      %v811 = vpop.permute.xlu0 %810
      %v813 = vsub.f32 %v794, %v811
      %v814 = vmul.f32 %v813, 1.442695
      %v815 = vpow.pop %v814
      %s816 = scalar_lea.vmem [#allocation3], 24
      %v817 = vld [vmem:[%s816] sm:$0xff]
      %v818 = vmul.f32 %v807, %v817
      %v819 = vsel %vm388, %v815, 0.0
      %820 = vadd.xlane.f32.xlu0 %v819
      %v821 = vpop.xlane.xlu0 %820
      %v822 = vadd.f32 %v818, %v821
      %823 = vst.msk [vmem:[%s816] sm:$0xff] %vm410, %v822
      %s824 = scalar_lea.vmem [#allocation4], 24
      %v825 = vld [vmem:[%s824] sm:$0xff]
      %827 = vset.pattern.permute.xlu0 0
      %828 = vperm.xlu0 %827, %v807
      %v829 = vpop.permute.xlu0 %828
      %v831 = vmul.f32 %v829, %v825
      %v832 = vpack.c.bf16 %v815, %v815
      %833 = vrot.lane.b32.xlu0 %v562, 32
      %v834 = vpop.permute.xlu0 %833
      %v836 = vsel %vm388, %v832, 0
      %v839 = vsel %vm423, %v834, 0
      %841 = vmatprep.subr.bf16.mxu0 0
      %842 = vmatpush1.bf16.msra.mxu0 0
      %843 = vmatprep.subr.bf16.mxu0 0
      %844 = vmatpush1.bf16.msra.mxu0 0
      %845 = vmatprep.subr.bf16.mxu0 0
      %846 = vmatpush1.bf16.msra.mxu0 0
      %847 = vmatprep.subr.bf16.mxu0 0
      %848 = vmatpush1.bf16.msra.mxu0 0
      %849 = vmatprep.subr.bf16.mxu0 0
      %850 = vmatpush1.bf16.msra.mxu0 0
      %851 = vmatprep.subr.bf16.mxu0 0
      %852 = vmatpush1.bf16.msra.mxu0 0
      %853 = vmatprep.subr.bf16.mxu0 0
      %854 = vmatpush1.bf16.msra.mxu0 0
      %855 = vmatprep.subr.bf16.mxu0 0
      %856 = vmatpush1.bf16.msra.mxu0 %v839
      %857 = vmatprep.subr.bf16.mxu0 0
      %858 = vmatpush2.bf16.msra.mxu0 0
      %859 = vmatprep.subr.bf16.mxu0 0
      %860 = vmatpush2.bf16.msra.mxu0 0
      %861 = vmatprep.subr.bf16.mxu0 0
      %862 = vmatpush2.bf16.msra.mxu0 0
      %863 = vmatprep.subr.bf16.mxu0 0
      %864 = vmatpush2.bf16.msra.mxu0 0
      %865 = vmatprep.subr.bf16.mxu0 0
      %866 = vmatpush2.bf16.msra.mxu0 0
      %867 = vmatprep.subr.bf16.mxu0 0
      %868 = vmatpush2.bf16.msra.mxu0 0
      %869 = vmatprep.subr.bf16.mxu0 0
      %870 = vmatpush2.bf16.msra.mxu0 0
      %871 = vmatprep.subr.bf16.mxu0 0
      %872 = vmatpush2.bf16.msra.mxu0 0
      %873 = vmatprep.mubr.bf16.mxu0 0
      %874 = vmatmul.mubr.bf16.gmra.mxu0 %v836
      %v875 = vpop.f32.mrf.mxu0
      %v876 = vadd.f32 0.0, %v875
      %v877 = vpop.f32.mrf.mxu0
      %v878 = vpop.f32.mrf.mxu0
      %v879 = vpop.f32.mrf.mxu0
      %880 = vdwg.mxu0
      %v881 = vadd.f32 %v831, %v876
      %882 = vst.msk [vmem:[%s824] sm:$0xff] %vm340, %v881
      %883 = vst.msk [vmem:[%s799] sm:$0xff] %vm410, %v804
      // Predicated region
      $region37: #{attention_forward.4} parent=31 // pred_check
        %p884 = pneg %p318
      $region38: #{attention_forward.4} parent=31 // pred_check_branch
        %886 = sbr.rel (%p884) target = $region40
      $region39: #{attention_forward.4} parent=31 // pred_region
        %v887 = vld [vmem:[#allocation3] sm:$0xff]
        %v888 = vld [vmem:[#allocation3 + $0x8] sm:$0xff]
        %v889 = vld [vmem:[#allocation3 + $0x10] sm:$0xff]
        %v890 = vld [vmem:[#allocation3 + $0x18] sm:$0xff]
        %v891 = vrcp.pop %v887
        %v892 = vrcp.pop %v888
        %v893 = vrcp.pop %v889
        %v894 = vrcp.pop %v890
        %v895 = vld [vmem:[#allocation4] sm:$0xff]
        %897 = vset.pattern.permute.xlu0 0
        %898 = vperm.xlu0 %897, %v891
        %v899 = vpop.permute.xlu0 %898
        %v901 = vmul.f32 %v895, %v899
        %v902 = vld [vmem:[%s551] sm:$0xff]
        %904 = vset.pattern.permute.xlu0 0
        %905 = vperm.xlu0 %904, %v892
        %v906 = vpop.permute.xlu0 %905
        %v908 = vmul.f32 %v902, %v906
        %v909 = vld [vmem:[%s689] sm:$0xff]
        %911 = vset.pattern.permute.xlu0 0
        %912 = vperm.xlu0 %911, %v893
        %v913 = vpop.permute.xlu0 %912
        %v915 = vmul.f32 %v909, %v913
        %v916 = vld [vmem:[%s824] sm:$0xff]
        %918 = vset.pattern.permute.xlu0 0
        %919 = vperm.xlu0 %918, %v894
        %v920 = vpop.permute.xlu0 %919
        %v922 = vmul.f32 %v916, %v920
        %924 = vrot.lane.b32.xlu0 %v908, 32
        %v925 = vpop.permute.xlu0 %924
        %928 = vrot.lane.b32.xlu0 %v915, 64
        %v929 = vpop.permute.xlu0 %928
        %932 = vrot.lane.b32.xlu0 %v922, 96
        %v933 = vpop.permute.xlu0 %932
        %v935 = vsel %vm340, %v901, %v925
        %vm936 = vcmask 523264
        %v937 = vsel %vm936, %v935, %v929
        %vm938 = vcmask 785408
        %v939 = vsel %vm938, %v937, %v933
        %v940 = vpack.c.bf16 %v939, %v939
        %941 = vst [vmem:[%s314] sm:$0xf] %v940
      $region40: #{attention_forward.4} parent=31 // pred_fallthru
        _
      %s942 = sadd.s32 %s20, %s22
      %p943 = scmp.lt.s32.totalorder %s942, 1
      %s944 = scalar_select %p943, %s942, 1
      %p945 = scmp.lt.s32.totalorder %s21, 0
      %s946 = scalar_select %p945, %s21, 0
      %s947 = sadd.s32 %s946, %s944
      %s948 = smul.addr %s947, 4
      %s949 = scalar_lea.vmem %s3, %s948
      // Predicated region
      $region41: #{attention_forward.4} parent=31 // pred_check
        %p950 = pneg %p156
      $region42: #{attention_forward.4} parent=31 // pred_check_branch
        %952 = sbr.rel (%p950) target = $region44
      $region43: #{attention_forward.4} parent=31 // pred_region
        %s953 = sadd.s32 %s20, %s22
      $region44: #{attention_forward.4} parent=31 // pred_fallthru
        _
    $region32: #{attention_forward.4} parent=5 // pred_fallthru
      _
    %p954 = scmp.le.s32.totalorder 2, %s9
    // Predicated region
    $region45: #{attention_forward.4} parent=5 // pred_check
      %p955 = pneg %p954
    $region46: #{attention_forward.4} parent=5 // pred_check_branch
      %957 = sbr.rel (%p955) target = $region48
    $region47: #{attention_forward.4} parent=5 // pred_region
      %s958 = ssub.s32 %s9, 2
      // Predicated region
      $region49: #{attention_forward.4} parent=47 // pred_check
        %p959 = pneg %p162
      $region50: #{attention_forward.4} parent=47 // pred_check_branch
        %961 = sbr.rel (%p959) target = $region52
      $region51: #{attention_forward.4} parent=47 // pred_region
        %s962 = sadd.s32 %s24, %s26
        %p963 = scmp.lt.s32.totalorder %s962, 1
        %s964 = scalar_select %p963, %s962, 1
        %p965 = scmp.lt.s32.totalorder %s25, 0
        %s966 = scalar_select %p965, %s25, 0
        %s967 = sadd.s32 %s966, %s964
        %s968 = smul.addr %s967, 4
        %s969 = scalar_lea.vmem %s3, %s968
      $region52: #{attention_forward.4} parent=47 // pred_fallthru
        _
    $region48: #{attention_forward.4} parent=5 // pred_fallthru
      _
  $region6: #{attention_forward.4} parent=0 // loop_footer
    %s13 = sadd.s32 1, %s9
  $region7: #{attention_forward.4} parent=0 // loop_footer_branch
    %8 = sbr.rel target = $region3
  $region8: #{attention_forward.4} parent=0 // loop_exit
    _

</llo_original>
